<compile_context>
chip_gen: v7x
topology: tpu7x:2x2x1
jax: 0.10.0
libtpu: 0.0.40
codegen_flags: <defaults>
</compile_context>

<pallas_src>
import jax
import jax.numpy as jnp
from jax import lax
from jax.experimental import pallas as pl
from jax.experimental.pallas import tpu as pltpu


_VMEM_LIMIT = 48 * 1024 * 1024   # safe on v5e/v6e (128 MiB) and v7x (64 MiB)


def _cparams(*sem):
    return pltpu.CompilerParams(dimension_semantics=sem,
                                vmem_limit_bytes=_VMEM_LIMIT)


def _pick_tile(m, target):
    """Largest tile <= target that divides m and keeps the lane dim legal."""
    t = min(target, m)
    while m % t:
        t -= 1
    if t != m and t % 128:
        t = m        # fall back to a single full-extent tile (always legal)
    return t


# ---------------------------------------------------------------------------
# Pallas kernels (channels-first: blocks are (C, tm) with M on lanes)
# ---------------------------------------------------------------------------
def _conv01_kernel(x_ref, w0_ref, w1_ref, a1_ref, x0_ref, h1_ref):
    """x0 = w0ᵀ x ; h1 = PReLU(w1ᵀ x0).  Fused conv0+conv1, two outputs."""
    x0 = jnp.dot(w0_ref[...], x_ref[...], preferred_element_type=jnp.float32)
    h1 = jnp.dot(w1_ref[...], x0.astype(w1_ref.dtype),
                 preferred_element_type=jnp.float32)
    h1 = jnp.where(h1 > 0, h1, h1 * a1_ref[...])
    x0_ref[...] = x0.astype(x0_ref.dtype)
    h1_ref[...] = h1.astype(h1_ref.dtype)


def _conv23_stats_kernel(p_ref, w2_ref, a2_ref, w3_ref,
                         o_ref, psum_ref, psq_ref):
    """h2 = PReLU(W2fold @ patches); h3 = w3ᵀ h2; per-tile BN sum / sumsq."""
    h2 = jnp.dot(w2_ref[...], p_ref[...], preferred_element_type=jnp.float32)
    h2 = jnp.where(h2 > 0, h2, h2 * a2_ref[...])
    y = jnp.dot(w3_ref[...], h2.astype(w3_ref.dtype),
                preferred_element_type=jnp.float32)          # (Cout, tm)
    ys = y.astype(o_ref.dtype)
    o_ref[...] = ys
    yf = ys.astype(jnp.float32)
    psum_ref[0] = jnp.sum(yf, axis=1, keepdims=True)          # (Cout, 1)
    psq_ref[0] = jnp.sum(yf * yf, axis=1, keepdims=True)


def _bn_res_prelu_kernel(h_ref, x0_ref, scale_ref, shift_ref, a_ref, o_ref):
    """y = PReLU( x0 + h*scale + shift )  -- BN folded into scale/shift."""
    y = (h_ref[...].astype(jnp.float32) * scale_ref[...] + shift_ref[...]
         + x0_ref[...].astype(jnp.float32))
    o_ref[...] = jnp.where(y > 0, y, y * a_ref[...]).astype(o_ref.dtype)


# ---------------------------------------------------------------------------
# Pallas wrappers
# ---------------------------------------------------------------------------
def fused_conv0_conv1(xt, w0t, w1t, a1, *, tm):
    """xt: (Cin, M) -> (x0t (Cout, M), h1t (mid, M)), conv0/conv1/PReLU1 fused."""
    cin, m = xt.shape
    cout = w0t.shape[0]
    mid = w1t.shape[0]
    dt = xt.dtype
    return pl.pallas_call(
        _conv01_kernel,
        out_shape=(jax.ShapeDtypeStruct((cout, m), dt),
                   jax.ShapeDtypeStruct((mid, m), dt)),
        grid=(m // tm,),
        in_specs=[
            pl.BlockSpec((cin, tm), lambda i: (0, i)),
            pl.BlockSpec((cout, cin), lambda i: (0, 0)),
            pl.BlockSpec((mid, cout), lambda i: (0, 0)),
            pl.BlockSpec((mid, 1), lambda i: (0, 0)),
        ],
        out_specs=(pl.BlockSpec((cout, tm), lambda i: (0, i)),
                   pl.BlockSpec((mid, tm), lambda i: (0, i))),
        compiler_params=_cparams("parallel"),
    )(xt, w0t.astype(dt), w1t.astype(dt), a1.reshape(mid, 1).astype(dt))


def conv2_conv3_bnstats(patches, w2f, a2, w3t, *, tm):
    """patches: (125*mid, M) folded taps; returns h3 (Cout, M) + partial stats."""
    k, m = patches.shape
    mid = w2f.shape[0]
    cout = w3t.shape[0]
    dt = patches.dtype
    n_tiles = m // tm
    return pl.pallas_call(
        _conv23_stats_kernel,
        out_shape=(jax.ShapeDtypeStruct((cout, m), dt),
                   jax.ShapeDtypeStruct((n_tiles, cout, 1), jnp.float32),
                   jax.ShapeDtypeStruct((n_tiles, cout, 1), jnp.float32)),
        grid=(n_tiles,),
        in_specs=[
            pl.BlockSpec((k, tm), lambda i: (0, i)),
            pl.BlockSpec((mid, k), lambda i: (0, 0)),     # weight VMEM-resident
            pl.BlockSpec((mid, 1), lambda i: (0, 0)),
            pl.BlockSpec((cout, mid), lambda i: (0, 0)),
        ],
        out_specs=(pl.BlockSpec((cout, tm), lambda i: (0, i)),
                   pl.BlockSpec((1, cout, 1), lambda i: (i, 0, 0)),
                   pl.BlockSpec((1, cout, 1), lambda i: (i, 0, 0))),
        compiler_params=_cparams("parallel"),
    )(patches, w2f.astype(dt), a2.reshape(mid, 1).astype(dt), w3t.astype(dt))


def bn_residual_prelu(h3, x0, scale, shift, alpha, *, tm, out_dtype):
    """PReLU(x0 + h3*scale + shift), fused elementwise.  h3, x0: (C, M)."""
    c, m = h3.shape
    return pl.pallas_call(
        _bn_res_prelu_kernel,
        out_shape=jax.ShapeDtypeStruct((c, m), out_dtype),
        grid=(m // tm,),
        in_specs=[
            pl.BlockSpec((c, tm), lambda i: (0, i)),
            pl.BlockSpec((c, tm), lambda i: (0, i)),
            pl.BlockSpec((c, 1), lambda i: (0, 0)),
            pl.BlockSpec((c, 1), lambda i: (0, 0)),
            pl.BlockSpec((c, 1), lambda i: (0, 0)),
        ],
        out_specs=pl.BlockSpec((c, tm), lambda i: (0, i)),
        compiler_params=_cparams("parallel"),
    )(h3, x0,
      scale.reshape(c, 1).astype(jnp.float32),
      shift.reshape(c, 1).astype(jnp.float32),
      alpha.reshape(c, 1).astype(jnp.float32))


# ---------------------------------------------------------------------------
# JAX glue: channels-first im2col for the dilated 5x5x5 conv (pure slicing)
# ---------------------------------------------------------------------------
def im2col_dilated_cf(h1t, n, d, h, w, ksize=5, dilation=3, pad=6):
    """h1t: (mid, N*D*H*W) -> (ksize**3 * mid, N*D*H*W) folded dilated taps."""
    mid = h1t.shape[0]
    vol = h1t.reshape(mid, n, d, h, w)
    vp = jnp.pad(vol, ((0, 0), (0, 0), (pad, pad), (pad, pad), (pad, pad)))
    taps = []
    for kd in range(ksize):
        for kh in range(ksize):
            for kw in range(ksize):
                sl = vp[:, :,
                        kd * dilation: kd * dilation + d,
                        kh * dilation: kh * dilation + h,
                        kw * dilation: kw * dilation + w]
                taps.append(sl.reshape(mid, n * d * h * w))
    return jnp.concatenate(taps, axis=0)          # (125*mid, M), tap-major rows


# ---------------------------------------------------------------------------
# Full ResidualLayer forward (reduce=False path)
# ---------------------------------------------------------------------------
def residual_layer_forward(x, params, *, tm=1024, compute_dtype=jnp.float32):
    """x: (N, D, H, W, in_chs) NDHWC.  Returns (N, D, H, W, out_chs)."""
    n, d, h, w, cin = x.shape
    m = n * d * h * w
    out_chs = params["gamma"].shape[0]
    mid = out_chs // 2
    dt = compute_dtype
    itemsize = jnp.dtype(dt).itemsize

    tm1 = _pick_tile(m, tm)
    # budget the conv2/conv3 tile so the double-buffered folded-K block fits VMEM
    tm2 = _pick_tile(m, min(tm, max(128, _VMEM_LIMIT // 4 // (125 * mid * itemsize))))

    # channels-first flat activations: (C, M) with M on the lane axis
    xt = x.reshape(m, cin).T.astype(dt)

    # conv0 (1x1x1 expand) + conv1 (1x1x1) + PReLU1, fused (one read of x)
    if "w0" in params:
        w0t = params["w0"].T                       # (out_chs, in_chs)
    else:
        w0t = jnp.eye(cin, dtype=jnp.float32)      # non-expand: x0 = x
    x0t, h1t = fused_conv0_conv1(xt, w0t, params["w1"].T, params["a1"], tm=tm1)

    # conv2 (5x5x5, dil=3, pad=6) + PReLU2 + conv3 (1x1x1) + BN partial stats
    patches = im2col_dilated_cf(h1t, n, d, h, w)                 # (125*mid, M)
    w2f = params["w2"].reshape(125, mid, mid).transpose(2, 0, 1).reshape(
        mid, 125 * mid)                                          # (mid, 125*mid)
    h3t, psum, psq = conv2_conv3_bnstats(patches, w2f, params["a2"],
                                         params["w3"].T, tm=tm2)

    # BatchNorm3d (training-mode batch statistics, biased variance, eps=1e-5)
    s = jnp.sum(psum, axis=0)[:, 0]
    sq = jnp.sum(psq, axis=0)[:, 0]
    mean = s / m
    var = sq / m - mean * mean
    scale = params["gamma"] / jnp.sqrt(var + 1e-5)
    shift = params["beta"] - mean * scale

    # BN + residual + PReLU3, fused
    yt = bn_residual_prelu(h3t, x0t, scale, shift, params["a3"],
                           tm=tm1, out_dtype=x.dtype)            # (out_chs, M)
    return jnp.transpose(yt.reshape(out_chs, n, d, h, w), (1, 2, 3, 4, 0))


# ---------------------------------------------------------------------------
# Pure-JAX reference (same math) for verification
# ---------------------------------------------------------------------------
def _conv3d_ref(x, w, dilation=1, pad=0):
    return lax.conv_general_dilated(
        x, w, window_strides=(1, 1, 1), padding=[(pad, pad)] * 3,
        rhs_dilation=(dilation,) * 3,
        dimension_numbers=("NDHWC", "DHWIO", "NDHWC"))


def residual_layer_reference(x, params):
    in_chs = x.shape[-1]
    if "w0" in params:
        w0 = params["w0"].reshape(1, 1, 1, in_chs, -1)
        x0 = _conv3d_ref(x, w0)
    else:
        x0 = x
    out_chs = x0.shape[-1]
    mid = out_chs // 2

    def prelu(v, a):
        return jnp.where(v > 0, v, v * a)

    h = _conv3d_ref(x0, params["w1"].reshape(1, 1, 1, out_chs, mid))
    h = prelu(h, params["a1"])
    h = _conv3d_ref(h, params["w2"], dilation=3, pad=6)
    h = prelu(h, params["a2"])
    h = _conv3d_ref(h, params["w3"].reshape(1, 1, 1, mid, out_chs))
    mean = h.mean(axis=(0, 1, 2, 3))
    var = h.var(axis=(0, 1, 2, 3))          # biased, as in BN training mode
    h = (h - mean) / jnp.sqrt(var + 1e-5) * params["gamma"] + params["beta"]
    return prelu(x0 + h, params["a3"])


# ---------------------------------------------------------------------------
if __name__ == "__main__":
    in_chs, out_chs = 4, 8          # in_chs != out_chs -> expand=True, reduce=False
    mid = out_chs // 2
    N, D, H, W = 2, 8, 8, 8

    key = jax.random.PRNGKey(0)
    ks = jax.random.split(key, 8)
    params = {
        "w0": 0.3 * jax.random.normal(ks[0], (in_chs, out_chs), jnp.float32),
        "w1": 0.3 * jax.random.normal(ks[1], (out_chs, mid), jnp.float32),
        "w2": 0.05 * jax.random.normal(ks[2], (5, 5, 5, mid, mid), jnp.float32),
        "w3": 0.3 * jax.random.normal(ks[3], (mid, out_chs), jnp.float32),
        "a1": jnp.full((mid,), 0.25, jnp.float32),      # PReLU default init
        "a2": jnp.full((mid,), 0.25, jnp.float32),
        "a3": jnp.full((out_chs,), 0.25, jnp.float32),
        "gamma": 1.0 + 0.1 * jax.random.normal(ks[4], (out_chs,), jnp.float32),
        "beta": 0.1 * jax.random.normal(ks[5], (out_chs,), jnp.float32),
    }
    x = jax.random.normal(ks[6], (N, D, H, W, in_chs), jnp.float32)

    fwd = jax.jit(residual_layer_forward)
    y = fwd(x, params)
    jax.block_until_ready(y)

    y_ref = residual_layer_reference(x, params)
    err = float(jnp.max(jnp.abs(y - y_ref)))
    assert err < 1e-3, f"mismatch vs reference, max abs err = {err}"
    print("KERNEL_OK")
</pallas_src>

<mosaic_0001>
module attributes {stable_mosaic.version = 11 : i64} {
  func.func @_conv01_kernel(%arg0: i32, %arg1: memref<4x1024xf32, #tpu.memory_space<vmem>>, %arg2: memref<8x4xf32, #tpu.memory_space<vmem>>, %arg3: memref<4x8xf32, #tpu.memory_space<vmem>>, %arg4: memref<4x1xf32, #tpu.memory_space<vmem>>, %arg5: memref<8x1024xf32, #tpu.memory_space<vmem>>, %arg6: memref<4x1024xf32, #tpu.memory_space<vmem>>) attributes {dimension_semantics = [#tpu.dimension_semantics<parallel>], iteration_bounds = array<i64: 1>, scalar_prefetch = 0 : i64, scratch_operands = 0 : i64, tpu.core_type = #tpu.core_type<tc>, window_params = [{transform_indices = @transform_0, window_bounds = array<i64: 4, 1024>}, {pipeline_mode = #tpu.pipeline_mode<synchronous>, transform_indices = @transform_1, window_bounds = array<i64: 8, 4>}, {pipeline_mode = #tpu.pipeline_mode<synchronous>, transform_indices = @transform_2, window_bounds = array<i64: 4, 8>}, {pipeline_mode = #tpu.pipeline_mode<synchronous>, transform_indices = @transform_3, window_bounds = array<i64: 4, 1>}, {transform_indices = @transform_4, window_bounds = array<i64: 8, 1024>}, {transform_indices = @transform_5, window_bounds = array<i64: 4, 1024>}]} {
    %c0 = arith.constant 0 : index
    %c0_0 = arith.constant 0 : index
    %0 = vector.load %arg2[%c0, %c0_0] : memref<8x4xf32, #tpu.memory_space<vmem>>, vector<8x4xf32>
    %c0_1 = arith.constant 0 : index
    %c0_2 = arith.constant 0 : index
    %1 = vector.load %arg1[%c0_1, %c0_2] : memref<4x1024xf32, #tpu.memory_space<vmem>>, vector<4x1024xf32>
    %cst = arith.constant dense<0.000000e+00> : vector<8x1024xf32>
    %2 = tpu.matmul %0, %1, %cst {dimension_numbers = #tpu.dot_dimension_numbers<[1], [0], [0], [1], [0, 0, 1, 1], [], []>} : vector<8x4xf32>, vector<4x1024xf32>, vector<8x1024xf32> -> vector<8x1024xf32>
    %c0_3 = arith.constant 0 : index
    %c0_4 = arith.constant 0 : index
    %3 = vector.load %arg3[%c0_3, %c0_4] : memref<4x8xf32, #tpu.memory_space<vmem>>, vector<4x8xf32>
    %cst_5 = arith.constant dense<0.000000e+00> : vector<4x1024xf32>
    %4 = tpu.matmul %3, %2, %cst_5 {dimension_numbers = #tpu.dot_dimension_numbers<[1], [0], [0], [1], [0, 0, 1, 1], [], []>} : vector<4x8xf32>, vector<8x1024xf32>, vector<4x1024xf32> -> vector<4x1024xf32>
    %cst_6 = arith.constant 0.000000e+00 : f32
    %5 = vector.broadcast %cst_6 : f32 to vector<4x1024xf32>
    %6 = arith.cmpf ogt, %4, %5 : vector<4x1024xf32>
    %c0_7 = arith.constant 0 : index
    %c0_8 = arith.constant 0 : index
    %7 = vector.load %arg4[%c0_7, %c0_8] : memref<4x1xf32, #tpu.memory_space<vmem>>, vector<4x1xf32>
    %8 = vector.broadcast %7 : vector<4x1xf32> to vector<4x1024xf32>
    %9 = arith.mulf %4, %8 : vector<4x1024xf32>
    %10 = arith.select %6, %4, %9 : vector<4x1024xi1>, vector<4x1024xf32>
    %c0_9 = arith.constant 0 : index
    %c0_10 = arith.constant 0 : index
    %11 = vector.load %arg5[%c0_9, %c0_10] : memref<8x1024xf32, #tpu.memory_space<vmem>>, vector<8x1024xf32>
    tpu.vector_store %arg5[%c0_9, %c0_10], %2 {strides = array<i32>} : memref<8x1024xf32, #tpu.memory_space<vmem>>, vector<8x1024xf32>,
    %c0_11 = arith.constant 0 : index
    %c0_12 = arith.constant 0 : index
    %12 = vector.load %arg6[%c0_11, %c0_12] : memref<4x1024xf32, #tpu.memory_space<vmem>>, vector<4x1024xf32>
    tpu.vector_store %arg6[%c0_11, %c0_12], %10 {strides = array<i32>} : memref<4x1024xf32, #tpu.memory_space<vmem>>, vector<4x1024xf32>,
    return
  }
  func.func @transform_0(%arg0: i32) -> (i32, i32) {
    %c0_i32 = arith.constant 0 : i32
    %c0_i32_0 = arith.constant 0 : i32
    return %c0_i32, %arg0 : i32, i32
  }
  func.func @transform_1(%arg0: i32) -> (i32, i32) {
    %c0_i32 = arith.constant 0 : i32
    %c0_i32_0 = arith.constant 0 : i32
    %c0_i32_1 = arith.constant 0 : i32
    return %c0_i32, %c0_i32_0 : i32, i32
  }
  func.func @transform_2(%arg0: i32) -> (i32, i32) {
    %c0_i32 = arith.constant 0 : i32
    %c0_i32_0 = arith.constant 0 : i32
    %c0_i32_1 = arith.constant 0 : i32
    return %c0_i32, %c0_i32_0 : i32, i32
  }
  func.func @transform_3(%arg0: i32) -> (i32, i32) {
    %c0_i32 = arith.constant 0 : i32
    %c0_i32_0 = arith.constant 0 : i32
    %c0_i32_1 = arith.constant 0 : i32
    return %c0_i32, %c0_i32_0 : i32, i32
  }
  func.func @transform_4(%arg0: i32) -> (i32, i32) {
    %c0_i32 = arith.constant 0 : i32
    %c0_i32_0 = arith.constant 0 : i32
    return %c0_i32, %arg0 : i32, i32
  }
  func.func @transform_5(%arg0: i32) -> (i32, i32) {
    %c0_i32 = arith.constant 0 : i32
    %c0_i32_0 = arith.constant 0 : i32
    return %c0_i32, %arg0 : i32, i32
  }
}

module attributes {stable_mosaic.version = 11 : i64} {
  func.func @_conv23_stats_kernel(%arg0: i32, %arg1: memref<500x1024xf32, #tpu.memory_space<vmem>>, %arg2: memref<4x500xf32, #tpu.memory_space<vmem>>, %arg3: memref<4x1xf32, #tpu.memory_space<vmem>>, %arg4: memref<8x4xf32, #tpu.memory_space<vmem>>, %arg5: memref<8x1024xf32, #tpu.memory_space<vmem>>, %arg6: memref<1x8x1xf32, #tpu.memory_space<vmem>>, %arg7: memref<1x8x1xf32, #tpu.memory_space<vmem>>) attributes {dimension_semantics = [#tpu.dimension_semantics<parallel>], iteration_bounds = array<i64: 1>, scalar_prefetch = 0 : i64, scratch_operands = 0 : i64, tpu.core_type = #tpu.core_type<tc>, window_params = [{transform_indices = @transform_0, window_bounds = array<i64: 500, 1024>}, {pipeline_mode = #tpu.pipeline_mode<synchronous>, transform_indices = @transform_1, window_bounds = array<i64: 4, 500>}, {pipeline_mode = #tpu.pipeline_mode<synchronous>, transform_indices = @transform_2, window_bounds = array<i64: 4, 1>}, {pipeline_mode = #tpu.pipeline_mode<synchronous>, transform_indices = @transform_3, window_bounds = array<i64: 8, 4>}, {transform_indices = @transform_4, window_bounds = array<i64: 8, 1024>}, {transform_indices = @transform_5, window_bounds = array<i64: 1, 8, 1>}, {transform_indices = @transform_6, window_bounds = array<i64: 1, 8, 1>}]} {
    %c0 = arith.constant 0 : index
    %c0_0 = arith.constant 0 : index
    %0 = vector.load %arg2[%c0, %c0_0] : memref<4x500xf32, #tpu.memory_space<vmem>>, vector<4x500xf32>
    %c0_1 = arith.constant 0 : index
    %c0_2 = arith.constant 0 : index
    %1 = vector.load %arg1[%c0_1, %c0_2] : memref<500x1024xf32, #tpu.memory_space<vmem>>, vector<500x1024xf32>
    %cst = arith.constant dense<0.000000e+00> : vector<4x1024xf32>
    %2 = tpu.matmul %0, %1, %cst {dimension_numbers = #tpu.dot_dimension_numbers<[1], [0], [0], [1], [0, 0, 1, 1], [], []>} : vector<4x500xf32>, vector<500x1024xf32>, vector<4x1024xf32> -> vector<4x1024xf32>
    %cst_3 = arith.constant 0.000000e+00 : f32
    %3 = vector.broadcast %cst_3 : f32 to vector<4x1024xf32>
    %4 = arith.cmpf ogt, %2, %3 : vector<4x1024xf32>
    %c0_4 = arith.constant 0 : index
    %c0_5 = arith.constant 0 : index
    %5 = vector.load %arg3[%c0_4, %c0_5] : memref<4x1xf32, #tpu.memory_space<vmem>>, vector<4x1xf32>
    %6 = vector.broadcast %5 : vector<4x1xf32> to vector<4x1024xf32>
    %7 = arith.mulf %2, %6 : vector<4x1024xf32>
    %8 = arith.select %4, %2, %7 : vector<4x1024xi1>, vector<4x1024xf32>
    %c0_6 = arith.constant 0 : index
    %c0_7 = arith.constant 0 : index
    %9 = vector.load %arg4[%c0_6, %c0_7] : memref<8x4xf32, #tpu.memory_space<vmem>>, vector<8x4xf32>
    %cst_8 = arith.constant dense<0.000000e+00> : vector<8x1024xf32>
    %10 = tpu.matmul %9, %8, %cst_8 {dimension_numbers = #tpu.dot_dimension_numbers<[1], [0], [0], [1], [0, 0, 1, 1], [], []>} : vector<8x4xf32>, vector<4x1024xf32>, vector<8x1024xf32> -> vector<8x1024xf32>
    %c0_9 = arith.constant 0 : index
    %c0_10 = arith.constant 0 : index
    %11 = vector.load %arg5[%c0_9, %c0_10] : memref<8x1024xf32, #tpu.memory_space<vmem>>, vector<8x1024xf32>
    tpu.vector_store %arg5[%c0_9, %c0_10], %10 {strides = array<i32>} : memref<8x1024xf32, #tpu.memory_space<vmem>>, vector<8x1024xf32>,
    %cst_11 = arith.constant dense<0.000000e+00> : vector<8xf32>
    %12 = vector.multi_reduction <add>, %10, %cst_11 [1] : vector<8x1024xf32> to vector<8xf32>
    %13 = vector.shape_cast %12 : vector<8xf32> to vector<8x1xf32>
    %c0_12 = arith.constant 0 : index
    %c0_13 = arith.constant 0 : index
    %c0_14 = arith.constant 0 : index
    %14 = vector.load %arg6[%c0_12, %c0_13, %c0_14] : memref<1x8x1xf32, #tpu.memory_space<vmem>>, vector<1x8x1xf32>
    %15 = vector.shape_cast %14 : vector<1x8x1xf32> to vector<8x1xf32>
    %16 = vector.shape_cast %13 : vector<8x1xf32> to vector<1x8x1xf32>
    tpu.vector_store %arg6[%c0_12, %c0_13, %c0_14], %16 {strides = array<i32>} : memref<1x8x1xf32, #tpu.memory_space<vmem>>, vector<1x8x1xf32>,
    %17 = arith.mulf %10, %10 : vector<8x1024xf32>
    %cst_15 = arith.constant dense<0.000000e+00> : vector<8xf32>
    %18 = vector.multi_reduction <add>, %17, %cst_15 [1] : vector<8x1024xf32> to vector<8xf32>
    %19 = vector.shape_cast %18 : vector<8xf32> to vector<8x1xf32>
    %c0_16 = arith.constant 0 : index
    %c0_17 = arith.constant 0 : index
    %c0_18 = arith.constant 0 : index
    %20 = vector.load %arg7[%c0_16, %c0_17, %c0_18] : memref<1x8x1xf32, #tpu.memory_space<vmem>>, vector<1x8x1xf32>
    %21 = vector.shape_cast %20 : vector<1x8x1xf32> to vector<8x1xf32>
    %22 = vector.shape_cast %19 : vector<8x1xf32> to vector<1x8x1xf32>
    tpu.vector_store %arg7[%c0_16, %c0_17, %c0_18], %22 {strides = array<i32>} : memref<1x8x1xf32, #tpu.memory_space<vmem>>, vector<1x8x1xf32>,
    return
  }
  func.func @transform_0(%arg0: i32) -> (i32, i32) {
    %c0_i32 = arith.constant 0 : i32
    %c0_i32_0 = arith.constant 0 : i32
    return %c0_i32, %arg0 : i32, i32
  }
  func.func @transform_1(%arg0: i32) -> (i32, i32) {
    %c0_i32 = arith.constant 0 : i32
    %c0_i32_0 = arith.constant 0 : i32
    %c0_i32_1 = arith.constant 0 : i32
    return %c0_i32, %c0_i32_0 : i32, i32
  }
  func.func @transform_2(%arg0: i32) -> (i32, i32) {
    %c0_i32 = arith.constant 0 : i32
    %c0_i32_0 = arith.constant 0 : i32
    %c0_i32_1 = arith.constant 0 : i32
    return %c0_i32, %c0_i32_0 : i32, i32
  }
  func.func @transform_3(%arg0: i32) -> (i32, i32) {
    %c0_i32 = arith.constant 0 : i32
    %c0_i32_0 = arith.constant 0 : i32
    %c0_i32_1 = arith.constant 0 : i32
    return %c0_i32, %c0_i32_0 : i32, i32
  }
  func.func @transform_4(%arg0: i32) -> (i32, i32) {
    %c0_i32 = arith.constant 0 : i32
    %c0_i32_0 = arith.constant 0 : i32
    return %c0_i32, %arg0 : i32, i32
  }
  func.func @transform_5(%arg0: i32) -> (i32, i32, i32) {
    %c0_i32 = arith.constant 0 : i32
    %c0_i32_0 = arith.constant 0 : i32
    %c0_i32_1 = arith.constant 0 : i32
    return %arg0, %c0_i32, %c0_i32_0 : i32, i32, i32
  }
  func.func @transform_6(%arg0: i32) -> (i32, i32, i32) {
    %c0_i32 = arith.constant 0 : i32
    %c0_i32_0 = arith.constant 0 : i32
    %c0_i32_1 = arith.constant 0 : i32
    return %arg0, %c0_i32, %c0_i32_0 : i32, i32, i32
  }
}

module attributes {stable_mosaic.version = 11 : i64} {
  func.func @_bn_res_prelu_kernel(%arg0: i32, %arg1: memref<8x1024xf32, #tpu.memory_space<vmem>>, %arg2: memref<8x1024xf32, #tpu.memory_space<vmem>>, %arg3: memref<8x1xf32, #tpu.memory_space<vmem>>, %arg4: memref<8x1xf32, #tpu.memory_space<vmem>>, %arg5: memref<8x1xf32, #tpu.memory_space<vmem>>, %arg6: memref<8x1024xf32, #tpu.memory_space<vmem>>) attributes {dimension_semantics = [#tpu.dimension_semantics<parallel>], iteration_bounds = array<i64: 1>, scalar_prefetch = 0 : i64, scratch_operands = 0 : i64, tpu.core_type = #tpu.core_type<tc>, window_params = [{transform_indices = @transform_0, window_bounds = array<i64: 8, 1024>}, {transform_indices = @transform_1, window_bounds = array<i64: 8, 1024>}, {pipeline_mode = #tpu.pipeline_mode<synchronous>, transform_indices = @transform_2, window_bounds = array<i64: 8, 1>}, {pipeline_mode = #tpu.pipeline_mode<synchronous>, transform_indices = @transform_3, window_bounds = array<i64: 8, 1>}, {pipeline_mode = #tpu.pipeline_mode<synchronous>, transform_indices = @transform_4, window_bounds = array<i64: 8, 1>}, {transform_indices = @transform_5, window_bounds = array<i64: 8, 1024>}]} {
    %c0 = arith.constant 0 : index
    %c0_0 = arith.constant 0 : index
    %0 = vector.load %arg1[%c0, %c0_0] : memref<8x1024xf32, #tpu.memory_space<vmem>>, vector<8x1024xf32>
    %c0_1 = arith.constant 0 : index
    %c0_2 = arith.constant 0 : index
    %1 = vector.load %arg3[%c0_1, %c0_2] : memref<8x1xf32, #tpu.memory_space<vmem>>, vector<8x1xf32>
    %2 = vector.broadcast %1 : vector<8x1xf32> to vector<8x1024xf32>
    %3 = arith.mulf %0, %2 : vector<8x1024xf32>
    %c0_3 = arith.constant 0 : index
    %c0_4 = arith.constant 0 : index
    %4 = vector.load %arg4[%c0_3, %c0_4] : memref<8x1xf32, #tpu.memory_space<vmem>>, vector<8x1xf32>
    %5 = vector.broadcast %4 : vector<8x1xf32> to vector<8x1024xf32>
    %6 = arith.addf %3, %5 : vector<8x1024xf32>
    %c0_5 = arith.constant 0 : index
    %c0_6 = arith.constant 0 : index
    %7 = vector.load %arg2[%c0_5, %c0_6] : memref<8x1024xf32, #tpu.memory_space<vmem>>, vector<8x1024xf32>
    %8 = arith.addf %6, %7 : vector<8x1024xf32>
    %cst = arith.constant 0.000000e+00 : f32
    %9 = vector.broadcast %cst : f32 to vector<8x1024xf32>
    %10 = arith.cmpf ogt, %8, %9 : vector<8x1024xf32>
    %c0_7 = arith.constant 0 : index
    %c0_8 = arith.constant 0 : index
    %11 = vector.load %arg5[%c0_7, %c0_8] : memref<8x1xf32, #tpu.memory_space<vmem>>, vector<8x1xf32>
    %12 = vector.broadcast %11 : vector<8x1xf32> to vector<8x1024xf32>
    %13 = arith.mulf %8, %12 : vector<8x1024xf32>
    %14 = arith.select %10, %8, %13 : vector<8x1024xi1>, vector<8x1024xf32>
    %c0_9 = arith.constant 0 : index
    %c0_10 = arith.constant 0 : index
    %15 = vector.load %arg6[%c0_9, %c0_10] : memref<8x1024xf32, #tpu.memory_space<vmem>>, vector<8x1024xf32>
    tpu.vector_store %arg6[%c0_9, %c0_10], %14 {strides = array<i32>} : memref<8x1024xf32, #tpu.memory_space<vmem>>, vector<8x1024xf32>,
    return
  }
  func.func @transform_0(%arg0: i32) -> (i32, i32) {
    %c0_i32 = arith.constant 0 : i32
    %c0_i32_0 = arith.constant 0 : i32
    return %c0_i32, %arg0 : i32, i32
  }
  func.func @transform_1(%arg0: i32) -> (i32, i32) {
    %c0_i32 = arith.constant 0 : i32
    %c0_i32_0 = arith.constant 0 : i32
    return %c0_i32, %arg0 : i32, i32
  }
  func.func @transform_2(%arg0: i32) -> (i32, i32) {
    %c0_i32 = arith.constant 0 : i32
    %c0_i32_0 = arith.constant 0 : i32
    %c0_i32_1 = arith.constant 0 : i32
    return %c0_i32, %c0_i32_0 : i32, i32
  }
  func.func @transform_3(%arg0: i32) -> (i32, i32) {
    %c0_i32 = arith.constant 0 : i32
    %c0_i32_0 = arith.constant 0 : i32
    %c0_i32_1 = arith.constant 0 : i32
    return %c0_i32, %c0_i32_0 : i32, i32
  }
  func.func @transform_4(%arg0: i32) -> (i32, i32) {
    %c0_i32 = arith.constant 0 : i32
    %c0_i32_0 = arith.constant 0 : i32
    %c0_i32_1 = arith.constant 0 : i32
    return %c0_i32, %c0_i32_0 : i32, i32
  }
  func.func @transform_5(%arg0: i32) -> (i32, i32) {
    %c0_i32 = arith.constant 0 : i32
    %c0_i32_0 = arith.constant 0 : i32
    return %c0_i32, %arg0 : i32, i32
  }
}

</mosaic_0001>

<llo_original>
// kernel: residual_layer_forward.3
$region0: #{residual_layer_forward.3}
  #allocation0 [shape = 'u32[]', space=smem, size = 0x4, offset = 0x4, fixed_abs, tag = 'smem constant byte address 0x4 - core index']
  #allocation1 [shape = 'u32[144,128]{1,0:T(1,128)}', space=vmem, size = 0x12000, scoped, tag = 'internal scratch']
  %s0 = inlined_call_operand.vmem [shape: f32[4,1024], index: 0, kind: input, shape index: {}]
  %s1 = inlined_call_operand.vmem [shape: f32[8,4], index: 1, kind: input, shape index: {}]
  %s2 = inlined_call_operand.hbm [shape: f32[4,8], index: 2, kind: input, shape index: {}]
  %s3 = inlined_call_operand.vmem [shape: f32[4,1], index: 3, kind: input, shape index: {}]
  %s4 = inlined_call_operand.vmem [shape: f32[8,1024], index: 4, kind: output, shape index: {0}]
  %s5 = inlined_call_operand.vmem [shape: f32[4,1024], index: 5, kind: output, shape index: {1}]
  %6 = xla_tuple %s4, %s5
  %s7 = sld [smem:[#allocation0]]
  $region38: #{residual_layer_forward.3} parent=0
    _
  %s9 = ssub.s32 1, %s7
  %s10 = scalar_select 0, %s9, %s7
  $region1: #{residual_layer_forward.3} parent=0
    #allocation2 [shape = 'u8[2048]{0}', space=vmem, size = 0x800, scoped, tag = 'input window, operand 2, single buffered']
    #allocation3 [shape = 's32[1]{0}', space=sflag, size = 0x4, scoped, tag = 'scoped memory for residual_layer_forward.3']
    %11 = vsyncpa [#allocation3], 0
    // Predicated region
    $region2: #{residual_layer_forward.3} parent=1 // pred_check
      _
    $region3: #{residual_layer_forward.3} parent=1 // pred_check_branch
      %13 = sbr.rel (0) target = $region5
    $region4: #{residual_layer_forward.3} parent=1 // pred_region
      _
    $region5: #{residual_layer_forward.3} parent=1 // pred_fallthru
      _
    // Predicated region
    $region6: #{residual_layer_forward.3} parent=1 // pred_check
      _
    $region7: #{residual_layer_forward.3} parent=1 // pred_check_branch
      %15 = sbr.rel (0) target = $region9
    $region8: #{residual_layer_forward.3} parent=1 // pred_region
      _
    $region9: #{residual_layer_forward.3} parent=1 // pred_fallthru
      _
    // Predicated region
    $region10: #{residual_layer_forward.3} parent=1 // pred_check
      _
    $region11: #{residual_layer_forward.3} parent=1 // pred_check_branch
      %17 = sbr.rel (0) target = $region13
    $region12: #{residual_layer_forward.3} parent=1 // pred_region
      %s19 = ssub.s32 64, 64
      %20 = vsyncadd [#allocation3], %s19
      %s22 = sshll.u32 [#allocation2], 4
      %s23 = int_to_ptr.vmem [resolvable:$true] %s22
      %25 = dma.hbm_to_vmem [thread:$0]  %s2, 64, %s23, [#allocation3]
    $region13: #{residual_layer_forward.3} parent=1 // pred_fallthru
      _
    // Predicated region
    $region14: #{residual_layer_forward.3} parent=1 // pred_check
      _
    $region15: #{residual_layer_forward.3} parent=1 // pred_check_branch
      %27 = sbr.rel (0) target = $region17
    $region16: #{residual_layer_forward.3} parent=1 // pred_region
      _
    $region17: #{residual_layer_forward.3} parent=1 // pred_fallthru
      _
    // Predicated region
    $region18: #{residual_layer_forward.3} parent=1 // pred_check
      _
    $region19: #{residual_layer_forward.3} parent=1 // pred_check_branch
      %29 = sbr.rel (0) target = $region21
    $region20: #{residual_layer_forward.3} parent=1 // pred_region
      %30 = dma.done [#allocation3], 64
    $region21: #{residual_layer_forward.3} parent=1 // pred_fallthru
      _
    %v31 = vld [vmem:[%s1] sm:$0xff]
    %v32 = vld [vmem:[%s0] sm:$0xff]
    %v33 = vld [vmem:[%s0 + $0x8] sm:$0xff]
    %v34 = vld [vmem:[%s0 + $0x10] sm:$0xff]
    %v35 = vld [vmem:[%s0 + $0x18] sm:$0xff]
    %v40 = vcombine.high %v32, %v32
    %v41 = vcombine.high %v33, %v33
    %v42 = vcombine.high %v34, %v34
    %v43 = vcombine.high %v35, %v35
    %vm44 = vcmask 31744
    %v46 = vsel %vm44, %v31, 0
    %vm48 = vcmask 1043456
    %v49 = vsel %vm48, %v32, 0
    %v51 = vsel %vm48, %v40, 0
    %v53 = vsel %vm48, %v33, 0
    %v55 = vsel %vm48, %v41, 0
    %v57 = vsel %vm48, %v34, 0
    %v59 = vsel %vm48, %v42, 0
    %v61 = vsel %vm48, %v35, 0
    %v63 = vsel %vm48, %v43, 0
    %65 = vmatprep.subr.mxu0 %v51
    %66 = vmatpush1.msra.mxu0 %v49
    %67 = vmatprep.subr.mxu0 0.0
    %68 = vmatpush1.msra.mxu0 0.0
    %69 = vmatprep.subr.mxu0 0.0
    %70 = vmatpush1.msra.mxu0 0.0
    %71 = vmatprep.subr.mxu0 0.0
    %72 = vmatpush1.msra.mxu0 0.0
    %73 = vmatprep.subr.mxu0 0.0
    %74 = vmatpush1.msra.mxu0 0.0
    %75 = vmatprep.subr.mxu0 0.0
    %76 = vmatpush1.msra.mxu0 0.0
    %77 = vmatprep.subr.mxu0 0.0
    %78 = vmatpush1.msra.mxu0 0.0
    %79 = vmatprep.subr.mxu0 0.0
    %80 = vmatpush1.msra.mxu0 0.0
    %81 = vmatprep.subr.mxu0 0.0
    %82 = vmatpush1.msra.mxu0 0.0
    %83 = vmatprep.subr.mxu0 0.0
    %84 = vmatpush1.msra.mxu0 0.0
    %85 = vmatprep.subr.mxu0 0.0
    %86 = vmatpush1.msra.mxu0 0.0
    %87 = vmatprep.subr.mxu0 0.0
    %88 = vmatpush1.msra.mxu0 0.0
    %89 = vmatprep.subr.mxu0 0.0
    %90 = vmatpush1.msra.mxu0 0.0
    %91 = vmatprep.subr.mxu0 0.0
    %92 = vmatpush1.msra.mxu0 0.0
    %93 = vmatprep.subr.mxu0 0.0
    %94 = vmatpush1.msra.mxu0 0.0
    %95 = vmatprep.subr.mxu0 0.0
    %96 = vmatpush1.msra.mxu0 0.0
    %97 = vmatprep.subr.mxu0 0.0
    %98 = vmatpush1.msra.mxu0 0.0
    %99 = vmatprep.subr.mxu0 0.0
    %100 = vmatpush1.msra.mxu0 0.0
    %101 = vmatprep.subr.mxu0 0.0
    %102 = vmatpush1.msra.mxu0 0.0
    %103 = vmatprep.subr.mxu0 0.0
    %104 = vmatpush1.msra.mxu0 0.0
    %105 = vmatprep.subr.mxu0 0.0
    %106 = vmatpush1.msra.mxu0 0.0
    %107 = vmatprep.subr.mxu0 0.0
    %108 = vmatpush1.msra.mxu0 0.0
    %109 = vmatprep.subr.mxu0 0.0
    %110 = vmatpush1.msra.mxu0 0.0
    %111 = vmatprep.subr.mxu0 0.0
    %112 = vmatpush1.msra.mxu0 0.0
    %113 = vmatprep.subr.mxu0 0.0
    %114 = vmatpush1.msra.mxu0 0.0
    %115 = vmatprep.subr.mxu0 0.0
    %116 = vmatpush1.msra.mxu0 0.0
    %117 = vmatprep.subr.mxu0 0.0
    %118 = vmatpush1.msra.mxu0 0.0
    %119 = vmatprep.subr.mxu0 0.0
    %120 = vmatpush1.msra.mxu0 0.0
    %121 = vmatprep.subr.mxu0 0.0
    %122 = vmatpush1.msra.mxu0 0.0
    %123 = vmatprep.subr.mxu0 0.0
    %124 = vmatpush1.msra.mxu0 0.0
    %125 = vmatprep.subr.mxu0 0.0
    %126 = vmatpush1.msra.mxu0 0.0
    %127 = vmatprep.subr.mxu0 0.0
    %128 = vmatpush1.msra.mxu0 0.0
    %129 = vmatprep.mubr.f32.mxu0 0.0
    %130 = vmatmul.mubr.f32.gmra.mrb[0].mxu0 %v46
    %v131 = vpop.f32.mrb[0].mxu0
    %v132 = vadd.f32 0.0, %v131
    %v133 = vpop.f32.mrb[0].mxu0
    %v134 = vadd.f32 0.0, %v133
    %135 = vdwg.mxu0
    %136 = vmatprep.subr.mxu0 %v55
    %137 = vmatpush1.msra.mxu0 %v53
    %138 = vmatprep.subr.mxu0 0.0
    %139 = vmatpush1.msra.mxu0 0.0
    %140 = vmatprep.subr.mxu0 0.0
    %141 = vmatpush1.msra.mxu0 0.0
    %142 = vmatprep.subr.mxu0 0.0
    %143 = vmatpush1.msra.mxu0 0.0
    %144 = vmatprep.subr.mxu0 0.0
    %145 = vmatpush1.msra.mxu0 0.0
    %146 = vmatprep.subr.mxu0 0.0
    %147 = vmatpush1.msra.mxu0 0.0
    %148 = vmatprep.subr.mxu0 0.0
    %149 = vmatpush1.msra.mxu0 0.0
    %150 = vmatprep.subr.mxu0 0.0
    %151 = vmatpush1.msra.mxu0 0.0
    %152 = vmatprep.subr.mxu0 0.0
    %153 = vmatpush1.msra.mxu0 0.0
    %154 = vmatprep.subr.mxu0 0.0
    %155 = vmatpush1.msra.mxu0 0.0
    %156 = vmatprep.subr.mxu0 0.0
    %157 = vmatpush1.msra.mxu0 0.0
    %158 = vmatprep.subr.mxu0 0.0
    %159 = vmatpush1.msra.mxu0 0.0
    %160 = vmatprep.subr.mxu0 0.0
    %161 = vmatpush1.msra.mxu0 0.0
    %162 = vmatprep.subr.mxu0 0.0
    %163 = vmatpush1.msra.mxu0 0.0
    %164 = vmatprep.subr.mxu0 0.0
    %165 = vmatpush1.msra.mxu0 0.0
    %166 = vmatprep.subr.mxu0 0.0
    %167 = vmatpush1.msra.mxu0 0.0
    %168 = vmatprep.subr.mxu0 0.0
    %169 = vmatpush1.msra.mxu0 0.0
    %170 = vmatprep.subr.mxu0 0.0
    %171 = vmatpush1.msra.mxu0 0.0
    %172 = vmatprep.subr.mxu0 0.0
    %173 = vmatpush1.msra.mxu0 0.0
    %174 = vmatprep.subr.mxu0 0.0
    %175 = vmatpush1.msra.mxu0 0.0
    %176 = vmatprep.subr.mxu0 0.0
    %177 = vmatpush1.msra.mxu0 0.0
    %178 = vmatprep.subr.mxu0 0.0
    %179 = vmatpush1.msra.mxu0 0.0
    %180 = vmatprep.subr.mxu0 0.0
    %181 = vmatpush1.msra.mxu0 0.0
    %182 = vmatprep.subr.mxu0 0.0
    %183 = vmatpush1.msra.mxu0 0.0
    %184 = vmatprep.subr.mxu0 0.0
    %185 = vmatpush1.msra.mxu0 0.0
    %186 = vmatprep.subr.mxu0 0.0
    %187 = vmatpush1.msra.mxu0 0.0
    %188 = vmatprep.subr.mxu0 0.0
    %189 = vmatpush1.msra.mxu0 0.0
    %190 = vmatprep.subr.mxu0 0.0
    %191 = vmatpush1.msra.mxu0 0.0
    %192 = vmatprep.subr.mxu0 0.0
    %193 = vmatpush1.msra.mxu0 0.0
    %194 = vmatprep.subr.mxu0 0.0
    %195 = vmatpush1.msra.mxu0 0.0
    %196 = vmatprep.subr.mxu0 0.0
    %197 = vmatpush1.msra.mxu0 0.0
    %198 = vmatprep.subr.mxu0 0.0
    %199 = vmatpush1.msra.mxu0 0.0
    %200 = vmatprep.mubr.f32.mxu0 0.0
    %201 = vmatmul.mubr.f32.gmra.mrb[0].mxu0 %v46
    %v202 = vpop.f32.mrb[0].mxu0
    %v203 = vadd.f32 0.0, %v202
    %v204 = vpop.f32.mrb[0].mxu0
    %v205 = vadd.f32 0.0, %v204
    %206 = vdwg.mxu0
    %207 = vmatprep.subr.mxu0 %v59
    %208 = vmatpush1.msra.mxu0 %v57
    %209 = vmatprep.subr.mxu0 0.0
    %210 = vmatpush1.msra.mxu0 0.0
    %211 = vmatprep.subr.mxu0 0.0
    %212 = vmatpush1.msra.mxu0 0.0
    %213 = vmatprep.subr.mxu0 0.0
    %214 = vmatpush1.msra.mxu0 0.0
    %215 = vmatprep.subr.mxu0 0.0
    %216 = vmatpush1.msra.mxu0 0.0
    %217 = vmatprep.subr.mxu0 0.0
    %218 = vmatpush1.msra.mxu0 0.0
    %219 = vmatprep.subr.mxu0 0.0
    %220 = vmatpush1.msra.mxu0 0.0
    %221 = vmatprep.subr.mxu0 0.0
    %222 = vmatpush1.msra.mxu0 0.0
    %223 = vmatprep.subr.mxu0 0.0
    %224 = vmatpush1.msra.mxu0 0.0
    %225 = vmatprep.subr.mxu0 0.0
    %226 = vmatpush1.msra.mxu0 0.0
    %227 = vmatprep.subr.mxu0 0.0
    %228 = vmatpush1.msra.mxu0 0.0
    %229 = vmatprep.subr.mxu0 0.0
    %230 = vmatpush1.msra.mxu0 0.0
    %231 = vmatprep.subr.mxu0 0.0
    %232 = vmatpush1.msra.mxu0 0.0
    %233 = vmatprep.subr.mxu0 0.0
    %234 = vmatpush1.msra.mxu0 0.0
    %235 = vmatprep.subr.mxu0 0.0
    %236 = vmatpush1.msra.mxu0 0.0
    %237 = vmatprep.subr.mxu0 0.0
    %238 = vmatpush1.msra.mxu0 0.0
    %239 = vmatprep.subr.mxu0 0.0
    %240 = vmatpush1.msra.mxu0 0.0
    %241 = vmatprep.subr.mxu0 0.0
    %242 = vmatpush1.msra.mxu0 0.0
    %243 = vmatprep.subr.mxu0 0.0
    %244 = vmatpush1.msra.mxu0 0.0
    %245 = vmatprep.subr.mxu0 0.0
    %246 = vmatpush1.msra.mxu0 0.0
    %247 = vmatprep.subr.mxu0 0.0
    %248 = vmatpush1.msra.mxu0 0.0
    %249 = vmatprep.subr.mxu0 0.0
    %250 = vmatpush1.msra.mxu0 0.0
    %251 = vmatprep.subr.mxu0 0.0
    %252 = vmatpush1.msra.mxu0 0.0
    %253 = vmatprep.subr.mxu0 0.0
    %254 = vmatpush1.msra.mxu0 0.0
    %255 = vmatprep.subr.mxu0 0.0
    %256 = vmatpush1.msra.mxu0 0.0
    %257 = vmatprep.subr.mxu0 0.0
    %258 = vmatpush1.msra.mxu0 0.0
    %259 = vmatprep.subr.mxu0 0.0
    %260 = vmatpush1.msra.mxu0 0.0
    %261 = vmatprep.subr.mxu0 0.0
    %262 = vmatpush1.msra.mxu0 0.0
    %263 = vmatprep.subr.mxu0 0.0
    %264 = vmatpush1.msra.mxu0 0.0
    %265 = vmatprep.subr.mxu0 0.0
    %266 = vmatpush1.msra.mxu0 0.0
    %267 = vmatprep.subr.mxu0 0.0
    %268 = vmatpush1.msra.mxu0 0.0
    %269 = vmatprep.subr.mxu0 0.0
    %270 = vmatpush1.msra.mxu0 0.0
    %271 = vmatprep.mubr.f32.mxu0 0.0
    %272 = vmatmul.mubr.f32.gmra.mrb[0].mxu0 %v46
    %v273 = vpop.f32.mrb[0].mxu0
    %v274 = vadd.f32 0.0, %v273
    %v275 = vpop.f32.mrb[0].mxu0
    %v276 = vadd.f32 0.0, %v275
    %277 = vdwg.mxu0
    %278 = vmatprep.subr.mxu0 %v63
    %279 = vmatpush1.msra.mxu0 %v61
    %280 = vmatprep.subr.mxu0 0.0
    %281 = vmatpush1.msra.mxu0 0.0
    %282 = vmatprep.subr.mxu0 0.0
    %283 = vmatpush1.msra.mxu0 0.0
    %284 = vmatprep.subr.mxu0 0.0
    %285 = vmatpush1.msra.mxu0 0.0
    %286 = vmatprep.subr.mxu0 0.0
    %287 = vmatpush1.msra.mxu0 0.0
    %288 = vmatprep.subr.mxu0 0.0
    %289 = vmatpush1.msra.mxu0 0.0
    %290 = vmatprep.subr.mxu0 0.0
    %291 = vmatpush1.msra.mxu0 0.0
    %292 = vmatprep.subr.mxu0 0.0
    %293 = vmatpush1.msra.mxu0 0.0
    %294 = vmatprep.subr.mxu0 0.0
    %295 = vmatpush1.msra.mxu0 0.0
    %296 = vmatprep.subr.mxu0 0.0
    %297 = vmatpush1.msra.mxu0 0.0
    %298 = vmatprep.subr.mxu0 0.0
    %299 = vmatpush1.msra.mxu0 0.0
    %300 = vmatprep.subr.mxu0 0.0
    %301 = vmatpush1.msra.mxu0 0.0
    %302 = vmatprep.subr.mxu0 0.0
    %303 = vmatpush1.msra.mxu0 0.0
    %304 = vmatprep.subr.mxu0 0.0
    %305 = vmatpush1.msra.mxu0 0.0
    %306 = vmatprep.subr.mxu0 0.0
    %307 = vmatpush1.msra.mxu0 0.0
    %308 = vmatprep.subr.mxu0 0.0
    %309 = vmatpush1.msra.mxu0 0.0
    %310 = vmatprep.subr.mxu0 0.0
    %311 = vmatpush1.msra.mxu0 0.0
    %312 = vmatprep.subr.mxu0 0.0
    %313 = vmatpush1.msra.mxu0 0.0
    %314 = vmatprep.subr.mxu0 0.0
    %315 = vmatpush1.msra.mxu0 0.0
    %316 = vmatprep.subr.mxu0 0.0
    %317 = vmatpush1.msra.mxu0 0.0
    %318 = vmatprep.subr.mxu0 0.0
    %319 = vmatpush1.msra.mxu0 0.0
    %320 = vmatprep.subr.mxu0 0.0
    %321 = vmatpush1.msra.mxu0 0.0
    %322 = vmatprep.subr.mxu0 0.0
    %323 = vmatpush1.msra.mxu0 0.0
    %324 = vmatprep.subr.mxu0 0.0
    %325 = vmatpush1.msra.mxu0 0.0
    %326 = vmatprep.subr.mxu0 0.0
    %327 = vmatpush1.msra.mxu0 0.0
    %328 = vmatprep.subr.mxu0 0.0
    %329 = vmatpush1.msra.mxu0 0.0
    %330 = vmatprep.subr.mxu0 0.0
    %331 = vmatpush1.msra.mxu0 0.0
    %332 = vmatprep.subr.mxu0 0.0
    %333 = vmatpush1.msra.mxu0 0.0
    %334 = vmatprep.subr.mxu0 0.0
    %335 = vmatpush1.msra.mxu0 0.0
    %336 = vmatprep.subr.mxu0 0.0
    %337 = vmatpush1.msra.mxu0 0.0
    %338 = vmatprep.subr.mxu0 0.0
    %339 = vmatpush1.msra.mxu0 0.0
    %340 = vmatprep.subr.mxu0 0.0
    %341 = vmatpush1.msra.mxu0 0.0
    %342 = vmatprep.mubr.f32.mxu0 0.0
    %343 = vmatmul.mubr.f32.gmra.mrb[0].mxu0 %v46
    %v344 = vpop.f32.mrb[0].mxu0
    %v345 = vadd.f32 0.0, %v344
    %v346 = vpop.f32.mrb[0].mxu0
    %v347 = vadd.f32 0.0, %v346
    %348 = vdwg.mxu0
    %v349 = vld [vmem:[#allocation2] sm:$0xf]
    %vm350 = vcmask 64512
    %v352 = vsel %vm350, %v349, 0
    %354 = vmatprep.subr.mxu0 %v134
    %355 = vmatpush1.msra.mxu0 %v132
    %356 = vmatprep.subr.mxu0 0.0
    %357 = vmatpush1.msra.mxu0 0.0
    %358 = vmatprep.subr.mxu0 0.0
    %359 = vmatpush1.msra.mxu0 0.0
    %360 = vmatprep.subr.mxu0 0.0
    %361 = vmatpush1.msra.mxu0 0.0
    %362 = vmatprep.subr.mxu0 0.0
    %363 = vmatpush1.msra.mxu0 0.0
    %364 = vmatprep.subr.mxu0 0.0
    %365 = vmatpush1.msra.mxu0 0.0
    %366 = vmatprep.subr.mxu0 0.0
    %367 = vmatpush1.msra.mxu0 0.0
    %368 = vmatprep.subr.mxu0 0.0
    %369 = vmatpush1.msra.mxu0 0.0
    %370 = vmatprep.subr.mxu0 0.0
    %371 = vmatpush1.msra.mxu0 0.0
    %372 = vmatprep.subr.mxu0 0.0
    %373 = vmatpush1.msra.mxu0 0.0
    %374 = vmatprep.subr.mxu0 0.0
    %375 = vmatpush1.msra.mxu0 0.0
    %376 = vmatprep.subr.mxu0 0.0
    %377 = vmatpush1.msra.mxu0 0.0
    %378 = vmatprep.subr.mxu0 0.0
    %379 = vmatpush1.msra.mxu0 0.0
    %380 = vmatprep.subr.mxu0 0.0
    %381 = vmatpush1.msra.mxu0 0.0
    %382 = vmatprep.subr.mxu0 0.0
    %383 = vmatpush1.msra.mxu0 0.0
    %384 = vmatprep.subr.mxu0 0.0
    %385 = vmatpush1.msra.mxu0 0.0
    %386 = vmatprep.subr.mxu0 0.0
    %387 = vmatpush1.msra.mxu0 0.0
    %388 = vmatprep.subr.mxu0 0.0
    %389 = vmatpush1.msra.mxu0 0.0
    %390 = vmatprep.subr.mxu0 0.0
    %391 = vmatpush1.msra.mxu0 0.0
    %392 = vmatprep.subr.mxu0 0.0
    %393 = vmatpush1.msra.mxu0 0.0
    %394 = vmatprep.subr.mxu0 0.0
    %395 = vmatpush1.msra.mxu0 0.0
    %396 = vmatprep.subr.mxu0 0.0
    %397 = vmatpush1.msra.mxu0 0.0
    %398 = vmatprep.subr.mxu0 0.0
    %399 = vmatpush1.msra.mxu0 0.0
    %400 = vmatprep.subr.mxu0 0.0
    %401 = vmatpush1.msra.mxu0 0.0
    %402 = vmatprep.subr.mxu0 0.0
    %403 = vmatpush1.msra.mxu0 0.0
    %404 = vmatprep.subr.mxu0 0.0
    %405 = vmatpush1.msra.mxu0 0.0
    %406 = vmatprep.subr.mxu0 0.0
    %407 = vmatpush1.msra.mxu0 0.0
    %408 = vmatprep.subr.mxu0 0.0
    %409 = vmatpush1.msra.mxu0 0.0
    %410 = vmatprep.subr.mxu0 0.0
    %411 = vmatpush1.msra.mxu0 0.0
    %412 = vmatprep.subr.mxu0 0.0
    %413 = vmatpush1.msra.mxu0 0.0
    %414 = vmatprep.subr.mxu0 0.0
    %415 = vmatpush1.msra.mxu0 0.0
    %416 = vmatprep.subr.mxu0 0.0
    %417 = vmatpush1.msra.mxu0 0.0
    %418 = vmatprep.mubr.f32.mxu0 0.0
    %419 = vmatmul.mubr.f32.gmra.mrb[0].mxu0 %v352
    %v420 = vpop.f32.mrb[0].mxu0
    %v421 = vadd.f32 0.0, %v420
    %v422 = vpop.f32.mrb[0].mxu0
    %v423 = vadd.f32 0.0, %v422
    %424 = vdwg.mxu0
    %425 = vmatprep.subr.mxu0 %v205
    %426 = vmatpush1.msra.mxu0 %v203
    %427 = vmatprep.subr.mxu0 0.0
    %428 = vmatpush1.msra.mxu0 0.0
    %429 = vmatprep.subr.mxu0 0.0
    %430 = vmatpush1.msra.mxu0 0.0
    %431 = vmatprep.subr.mxu0 0.0
    %432 = vmatpush1.msra.mxu0 0.0
    %433 = vmatprep.subr.mxu0 0.0
    %434 = vmatpush1.msra.mxu0 0.0
    %435 = vmatprep.subr.mxu0 0.0
    %436 = vmatpush1.msra.mxu0 0.0
    %437 = vmatprep.subr.mxu0 0.0
    %438 = vmatpush1.msra.mxu0 0.0
    %439 = vmatprep.subr.mxu0 0.0
    %440 = vmatpush1.msra.mxu0 0.0
    %441 = vmatprep.subr.mxu0 0.0
    %442 = vmatpush1.msra.mxu0 0.0
    %443 = vmatprep.subr.mxu0 0.0
    %444 = vmatpush1.msra.mxu0 0.0
    %445 = vmatprep.subr.mxu0 0.0
    %446 = vmatpush1.msra.mxu0 0.0
    %447 = vmatprep.subr.mxu0 0.0
    %448 = vmatpush1.msra.mxu0 0.0
    %449 = vmatprep.subr.mxu0 0.0
    %450 = vmatpush1.msra.mxu0 0.0
    %451 = vmatprep.subr.mxu0 0.0
    %452 = vmatpush1.msra.mxu0 0.0
    %453 = vmatprep.subr.mxu0 0.0
    %454 = vmatpush1.msra.mxu0 0.0
    %455 = vmatprep.subr.mxu0 0.0
    %456 = vmatpush1.msra.mxu0 0.0
    %457 = vmatprep.subr.mxu0 0.0
    %458 = vmatpush1.msra.mxu0 0.0
    %459 = vmatprep.subr.mxu0 0.0
    %460 = vmatpush1.msra.mxu0 0.0
    %461 = vmatprep.subr.mxu0 0.0
    %462 = vmatpush1.msra.mxu0 0.0
    %463 = vmatprep.subr.mxu0 0.0
    %464 = vmatpush1.msra.mxu0 0.0
    %465 = vmatprep.subr.mxu0 0.0
    %466 = vmatpush1.msra.mxu0 0.0
    %467 = vmatprep.subr.mxu0 0.0
    %468 = vmatpush1.msra.mxu0 0.0
    %469 = vmatprep.subr.mxu0 0.0
    %470 = vmatpush1.msra.mxu0 0.0
    %471 = vmatprep.subr.mxu0 0.0
    %472 = vmatpush1.msra.mxu0 0.0
    %473 = vmatprep.subr.mxu0 0.0
    %474 = vmatpush1.msra.mxu0 0.0
    %475 = vmatprep.subr.mxu0 0.0
    %476 = vmatpush1.msra.mxu0 0.0
    %477 = vmatprep.subr.mxu0 0.0
    %478 = vmatpush1.msra.mxu0 0.0
    %479 = vmatprep.subr.mxu0 0.0
    %480 = vmatpush1.msra.mxu0 0.0
    %481 = vmatprep.subr.mxu0 0.0
    %482 = vmatpush1.msra.mxu0 0.0
    %483 = vmatprep.subr.mxu0 0.0
    %484 = vmatpush1.msra.mxu0 0.0
    %485 = vmatprep.subr.mxu0 0.0
    %486 = vmatpush1.msra.mxu0 0.0
    %487 = vmatprep.subr.mxu0 0.0
    %488 = vmatpush1.msra.mxu0 0.0
    %489 = vmatprep.mubr.f32.mxu0 0.0
    %490 = vmatmul.mubr.f32.gmra.mrb[0].mxu0 %v352
    %v491 = vpop.f32.mrb[0].mxu0
    %v492 = vadd.f32 0.0, %v491
    %v493 = vpop.f32.mrb[0].mxu0
    %v494 = vadd.f32 0.0, %v493
    %495 = vdwg.mxu0
    %496 = vmatprep.subr.mxu0 %v276
    %497 = vmatpush1.msra.mxu0 %v274
    %498 = vmatprep.subr.mxu0 0.0
    %499 = vmatpush1.msra.mxu0 0.0
    %500 = vmatprep.subr.mxu0 0.0
    %501 = vmatpush1.msra.mxu0 0.0
    %502 = vmatprep.subr.mxu0 0.0
    %503 = vmatpush1.msra.mxu0 0.0
    %504 = vmatprep.subr.mxu0 0.0
    %505 = vmatpush1.msra.mxu0 0.0
    %506 = vmatprep.subr.mxu0 0.0
    %507 = vmatpush1.msra.mxu0 0.0
    %508 = vmatprep.subr.mxu0 0.0
    %509 = vmatpush1.msra.mxu0 0.0
    %510 = vmatprep.subr.mxu0 0.0
    %511 = vmatpush1.msra.mxu0 0.0
    %512 = vmatprep.subr.mxu0 0.0
    %513 = vmatpush1.msra.mxu0 0.0
    %514 = vmatprep.subr.mxu0 0.0
    %515 = vmatpush1.msra.mxu0 0.0
    %516 = vmatprep.subr.mxu0 0.0
    %517 = vmatpush1.msra.mxu0 0.0
    %518 = vmatprep.subr.mxu0 0.0
    %519 = vmatpush1.msra.mxu0 0.0
    %520 = vmatprep.subr.mxu0 0.0
    %521 = vmatpush1.msra.mxu0 0.0
    %522 = vmatprep.subr.mxu0 0.0
    %523 = vmatpush1.msra.mxu0 0.0
    %524 = vmatprep.subr.mxu0 0.0
    %525 = vmatpush1.msra.mxu0 0.0
    %526 = vmatprep.subr.mxu0 0.0
    %527 = vmatpush1.msra.mxu0 0.0
    %528 = vmatprep.subr.mxu0 0.0
    %529 = vmatpush1.msra.mxu0 0.0
    %530 = vmatprep.subr.mxu0 0.0
    %531 = vmatpush1.msra.mxu0 0.0
    %532 = vmatprep.subr.mxu0 0.0
    %533 = vmatpush1.msra.mxu0 0.0
    %534 = vmatprep.subr.mxu0 0.0
    %535 = vmatpush1.msra.mxu0 0.0
    %536 = vmatprep.subr.mxu0 0.0
    %537 = vmatpush1.msra.mxu0 0.0
    %538 = vmatprep.subr.mxu0 0.0
    %539 = vmatpush1.msra.mxu0 0.0
    %540 = vmatprep.subr.mxu0 0.0
    %541 = vmatpush1.msra.mxu0 0.0
    %542 = vmatprep.subr.mxu0 0.0
    %543 = vmatpush1.msra.mxu0 0.0
    %544 = vmatprep.subr.mxu0 0.0
    %545 = vmatpush1.msra.mxu0 0.0
    %546 = vmatprep.subr.mxu0 0.0
    %547 = vmatpush1.msra.mxu0 0.0
    %548 = vmatprep.subr.mxu0 0.0
    %549 = vmatpush1.msra.mxu0 0.0
    %550 = vmatprep.subr.mxu0 0.0
    %551 = vmatpush1.msra.mxu0 0.0
    %552 = vmatprep.subr.mxu0 0.0
    %553 = vmatpush1.msra.mxu0 0.0
    %554 = vmatprep.subr.mxu0 0.0
    %555 = vmatpush1.msra.mxu0 0.0
    %556 = vmatprep.subr.mxu0 0.0
    %557 = vmatpush1.msra.mxu0 0.0
    %558 = vmatprep.subr.mxu0 0.0
    %559 = vmatpush1.msra.mxu0 0.0
    %560 = vmatprep.mubr.f32.mxu0 0.0
    %561 = vmatmul.mubr.f32.gmra.mrb[0].mxu0 %v352
    %v562 = vpop.f32.mrb[0].mxu0
    %v563 = vadd.f32 0.0, %v562
    %v564 = vpop.f32.mrb[0].mxu0
    %v565 = vadd.f32 0.0, %v564
    %566 = vdwg.mxu0
    %567 = vmatprep.subr.mxu0 %v347
    %568 = vmatpush1.msra.mxu0 %v345
    %569 = vmatprep.subr.mxu0 0.0
    %570 = vmatpush1.msra.mxu0 0.0
    %571 = vmatprep.subr.mxu0 0.0
    %572 = vmatpush1.msra.mxu0 0.0
    %573 = vmatprep.subr.mxu0 0.0
    %574 = vmatpush1.msra.mxu0 0.0
    %575 = vmatprep.subr.mxu0 0.0
    %576 = vmatpush1.msra.mxu0 0.0
    %577 = vmatprep.subr.mxu0 0.0
    %578 = vmatpush1.msra.mxu0 0.0
    %579 = vmatprep.subr.mxu0 0.0
    %580 = vmatpush1.msra.mxu0 0.0
    %581 = vmatprep.subr.mxu0 0.0
    %582 = vmatpush1.msra.mxu0 0.0
    %583 = vmatprep.subr.mxu0 0.0
    %584 = vmatpush1.msra.mxu0 0.0
    %585 = vmatprep.subr.mxu0 0.0
    %586 = vmatpush1.msra.mxu0 0.0
    %587 = vmatprep.subr.mxu0 0.0
    %588 = vmatpush1.msra.mxu0 0.0
    %589 = vmatprep.subr.mxu0 0.0
    %590 = vmatpush1.msra.mxu0 0.0
    %591 = vmatprep.subr.mxu0 0.0
    %592 = vmatpush1.msra.mxu0 0.0
    %593 = vmatprep.subr.mxu0 0.0
    %594 = vmatpush1.msra.mxu0 0.0
    %595 = vmatprep.subr.mxu0 0.0
    %596 = vmatpush1.msra.mxu0 0.0
    %597 = vmatprep.subr.mxu0 0.0
    %598 = vmatpush1.msra.mxu0 0.0
    %599 = vmatprep.subr.mxu0 0.0
    %600 = vmatpush1.msra.mxu0 0.0
    %601 = vmatprep.subr.mxu0 0.0
    %602 = vmatpush1.msra.mxu0 0.0
    %603 = vmatprep.subr.mxu0 0.0
    %604 = vmatpush1.msra.mxu0 0.0
    %605 = vmatprep.subr.mxu0 0.0
    %606 = vmatpush1.msra.mxu0 0.0
    %607 = vmatprep.subr.mxu0 0.0
    %608 = vmatpush1.msra.mxu0 0.0
    %609 = vmatprep.subr.mxu0 0.0
    %610 = vmatpush1.msra.mxu0 0.0
    %611 = vmatprep.subr.mxu0 0.0
    %612 = vmatpush1.msra.mxu0 0.0
    %613 = vmatprep.subr.mxu0 0.0
    %614 = vmatpush1.msra.mxu0 0.0
    %615 = vmatprep.subr.mxu0 0.0
    %616 = vmatpush1.msra.mxu0 0.0
    %617 = vmatprep.subr.mxu0 0.0
    %618 = vmatpush1.msra.mxu0 0.0
    %619 = vmatprep.subr.mxu0 0.0
    %620 = vmatpush1.msra.mxu0 0.0
    %621 = vmatprep.subr.mxu0 0.0
    %622 = vmatpush1.msra.mxu0 0.0
    %623 = vmatprep.subr.mxu0 0.0
    %624 = vmatpush1.msra.mxu0 0.0
    %625 = vmatprep.subr.mxu0 0.0
    %626 = vmatpush1.msra.mxu0 0.0
    %627 = vmatprep.subr.mxu0 0.0
    %628 = vmatpush1.msra.mxu0 0.0
    %629 = vmatprep.subr.mxu0 0.0
    %630 = vmatpush1.msra.mxu0 0.0
    %631 = vmatprep.mubr.f32.mxu0 0.0
    %632 = vmatmul.mubr.f32.gmra.mrb[0].mxu0 %v352
    %v633 = vpop.f32.mrb[0].mxu0
    %v634 = vadd.f32 0.0, %v633
    %v635 = vpop.f32.mrb[0].mxu0
    %v636 = vadd.f32 0.0, %v635
    %637 = vdwg.mxu0
    %vm638 = vcmp.gt.f32.partialorder %v421, 0.0
    %vm639 = vcmp.gt.f32.partialorder %v423, 0.0
    %vm640 = vcmp.gt.f32.partialorder %v492, 0.0
    %vm641 = vcmp.gt.f32.partialorder %v494, 0.0
    %vm642 = vcmp.gt.f32.partialorder %v563, 0.0
    %vm643 = vcmp.gt.f32.partialorder %v565, 0.0
    %vm644 = vcmp.gt.f32.partialorder %v634, 0.0
    %vm645 = vcmp.gt.f32.partialorder %v636, 0.0
    %v646 = vld [vmem:[%s3] sm:$0xf]
    %648 = vset.pattern.permute.xlu0 0
    %649 = vperm.xlu0 %648, %v646
    %v650 = vpop.permute.xlu0 %649
    %v652 = vmul.f32 %v421, %v650
    %v653 = vmul.f32 %v423, %v650
    %v654 = vmul.f32 %v492, %v650
    %v655 = vmul.f32 %v494, %v650
    %v656 = vmul.f32 %v563, %v650
    %v657 = vmul.f32 %v565, %v650
    %v658 = vmul.f32 %v634, %v650
    %v659 = vmul.f32 %v636, %v650
    %v660 = vsel %vm638, %v421, %v652
    %v661 = vsel %vm639, %v423, %v653
    %v662 = vsel %vm640, %v492, %v654
    %v663 = vsel %vm641, %v494, %v655
    %v664 = vsel %vm642, %v563, %v656
    %v665 = vsel %vm643, %v565, %v657
    %v666 = vsel %vm644, %v634, %v658
    %v667 = vsel %vm645, %v636, %v659
    %668 = vst [vmem:[%s4] sm:$0xff] %v132
    %669 = vst [vmem:[%s4 + $0x8] sm:$0xff] %v134
    %670 = vst [vmem:[%s4 + $0x10] sm:$0xff] %v203
    %671 = vst [vmem:[%s4 + $0x18] sm:$0xff] %v205
    %672 = vst [vmem:[%s4 + $0x20] sm:$0xff] %v274
    %673 = vst [vmem:[%s4 + $0x28] sm:$0xff] %v276
    %674 = vst [vmem:[%s4 + $0x30] sm:$0xff] %v345
    %675 = vst [vmem:[%s4 + $0x38] sm:$0xff] %v347
    %v684 = vcombine.low %v660, %v661
    %v685 = vcombine.low %v662, %v663
    %v686 = vcombine.low %v664, %v665
    %v687 = vcombine.low %v666, %v667
    %692 = vst [vmem:[%s5] sm:$0xff] %v684
    %693 = vst [vmem:[%s5 + $0x8] sm:$0xff] %v685
    %694 = vst [vmem:[%s5 + $0x10] sm:$0xff] %v686
    %695 = vst [vmem:[%s5 + $0x18] sm:$0xff] %v687
    // Predicated region
    $region22: #{residual_layer_forward.3} parent=1 // pred_check
      _
    $region23: #{residual_layer_forward.3} parent=1 // pred_check_branch
      %697 = sbr.rel (0) target = $region25
    $region24: #{residual_layer_forward.3} parent=1 // pred_region
      _
    $region25: #{residual_layer_forward.3} parent=1 // pred_fallthru
      _
    // Predicated region
    $region26: #{residual_layer_forward.3} parent=1 // pred_check
      _
    $region27: #{residual_layer_forward.3} parent=1 // pred_check_branch
      %699 = sbr.rel (0) target = $region29
    $region28: #{residual_layer_forward.3} parent=1 // pred_region
      _
    $region29: #{residual_layer_forward.3} parent=1 // pred_fallthru
      _
    // Predicated region
    $region30: #{residual_layer_forward.3} parent=1 // pred_check
      _
    $region31: #{residual_layer_forward.3} parent=1 // pred_check_branch
      %701 = sbr.rel (0) target = $region33
    $region32: #{residual_layer_forward.3} parent=1 // pred_region
      _
    $region33: #{residual_layer_forward.3} parent=1 // pred_fallthru
      _
    // Predicated region
    $region34: #{residual_layer_forward.3} parent=1 // pred_check
      _
    $region35: #{residual_layer_forward.3} parent=1 // pred_check_branch
      %703 = sbr.rel (0) target = $region37
    $region36: #{residual_layer_forward.3} parent=1 // pred_region
      _
    $region37: #{residual_layer_forward.3} parent=1 // pred_fallthru
      _
    %704 = vsyncpa [#allocation3], 1

// kernel: residual_layer_forward.4
$region0: #{residual_layer_forward.4}
  #allocation0 [shape = 'u32[]', space=smem, size = 0x4, offset = 0x4, fixed_abs, tag = 'smem constant byte address 0x4 - core index']
  #allocation1 [shape = 'u32[144,128]{1,0:T(1,128)}', space=vmem, size = 0x12000, scoped, tag = 'internal scratch']
  %s0 = inlined_call_operand.vmem [shape: f32[500,1024], index: 0, kind: input, shape index: {}]
  %s1 = inlined_call_operand.vmem [shape: f32[4,500], index: 1, kind: input, shape index: {}]
  %s2 = inlined_call_operand.vmem [shape: f32[4,1], index: 2, kind: input, shape index: {}]
  %s3 = inlined_call_operand.vmem [shape: f32[8,4], index: 3, kind: input, shape index: {}]
  %s4 = inlined_call_operand.vmem [shape: f32[8,1024], index: 4, kind: output, shape index: {0}]
  %s5 = inlined_call_operand.vmem [shape: f32[1,8,1], index: 5, kind: output, shape index: {1}]
  %s6 = inlined_call_operand.vmem [shape: f32[1,8,1], index: 6, kind: output, shape index: {2}]
  %7 = xla_tuple %s4, %s5, %s6
  %s8 = sld [smem:[#allocation0]]
  $region42: #{residual_layer_forward.4} parent=0
    _
  %s10 = ssub.s32 1, %s8
  %s11 = scalar_select 0, %s10, %s8
  // Predicated region
  $region2: #{residual_layer_forward.4} parent=0 // pred_check
    _
  $region3: #{residual_layer_forward.4} parent=0 // pred_check_branch
    %13 = sbr.rel (0) target = $region5
  $region4: #{residual_layer_forward.4} parent=0 // pred_region
    _
  $region5: #{residual_layer_forward.4} parent=0 // pred_fallthru
    _
  // Predicated region
  $region6: #{residual_layer_forward.4} parent=0 // pred_check
    _
  $region7: #{residual_layer_forward.4} parent=0 // pred_check_branch
    %15 = sbr.rel (0) target = $region9
  $region8: #{residual_layer_forward.4} parent=0 // pred_region
    _
  $region9: #{residual_layer_forward.4} parent=0 // pred_fallthru
    _
  // Predicated region
  $region10: #{residual_layer_forward.4} parent=0 // pred_check
    _
  $region11: #{residual_layer_forward.4} parent=0 // pred_check_branch
    %17 = sbr.rel (0) target = $region13
  $region12: #{residual_layer_forward.4} parent=0 // pred_region
    _
  $region13: #{residual_layer_forward.4} parent=0 // pred_fallthru
    _
  // Predicated region
  $region14: #{residual_layer_forward.4} parent=0 // pred_check
    _
  $region15: #{residual_layer_forward.4} parent=0 // pred_check_branch
    %19 = sbr.rel (0) target = $region17
  $region16: #{residual_layer_forward.4} parent=0 // pred_region
    _
  $region17: #{residual_layer_forward.4} parent=0 // pred_fallthru
    _
  %v20 = vld [vmem:[%s1] sm:$0xff]
  %v21 = vld [vmem:[%s1 + $0x8] sm:$0xff]
  %v22 = vld [vmem:[%s0] sm:$0xff]
  %v23 = vld [vmem:[%s0 + $0x8] sm:$0xff]
  %v24 = vld [vmem:[%s0 + $0x10] sm:$0xff]
  %v25 = vld [vmem:[%s0 + $0x18] sm:$0xff]
  %v26 = vld [vmem:[%s0 + $0x20] sm:$0xff]
  %v27 = vld [vmem:[%s0 + $0x28] sm:$0xff]
  %v28 = vld [vmem:[%s0 + $0x30] sm:$0xff]
  %v29 = vld [vmem:[%s0 + $0x38] sm:$0xff]
  %v30 = vld [vmem:[%s0 + $0x40] sm:$0xff]
  %v31 = vld [vmem:[%s0 + $0x48] sm:$0xff]
  %v32 = vld [vmem:[%s0 + $0x50] sm:$0xff]
  %v33 = vld [vmem:[%s0 + $0x58] sm:$0xff]
  %v34 = vld [vmem:[%s0 + $0x60] sm:$0xff]
  %v35 = vld [vmem:[%s0 + $0x68] sm:$0xff]
  %v36 = vld [vmem:[%s0 + $0x70] sm:$0xff]
  %v37 = vld [vmem:[%s0 + $0x78] sm:$0xff]
  %v38 = vld [vmem:[%s0 + $0x80] sm:$0xff]
  %v39 = vld [vmem:[%s0 + $0x88] sm:$0xff]
  %v40 = vld [vmem:[%s0 + $0x90] sm:$0xff]
  %v41 = vld [vmem:[%s0 + $0x98] sm:$0xff]
  %v42 = vld [vmem:[%s0 + $0xa0] sm:$0xff]
  %v43 = vld [vmem:[%s0 + $0xa8] sm:$0xff]
  %v44 = vld [vmem:[%s0 + $0xb0] sm:$0xff]
  %v45 = vld [vmem:[%s0 + $0xb8] sm:$0xff]
  %v46 = vld [vmem:[%s0 + $0xc0] sm:$0xff]
  %v47 = vld [vmem:[%s0 + $0xc8] sm:$0xff]
  %v48 = vld [vmem:[%s0 + $0xd0] sm:$0xff]
  %v49 = vld [vmem:[%s0 + $0xd8] sm:$0xff]
  %v50 = vld [vmem:[%s0 + $0xe0] sm:$0xff]
  %v51 = vld [vmem:[%s0 + $0xe8] sm:$0xff]
  %v52 = vld [vmem:[%s0 + $0xf0] sm:$0xff]
  %v53 = vld [vmem:[%s0 + $0xf8] sm:$0xff]
  %v54 = vld [vmem:[%s0 + $0x100] sm:$0xff]
  %v55 = vld [vmem:[%s0 + $0x108] sm:$0xff]
  %v56 = vld [vmem:[%s0 + $0x110] sm:$0xff]
  %v57 = vld [vmem:[%s0 + $0x118] sm:$0xff]
  %v58 = vld [vmem:[%s0 + $0x120] sm:$0xff]
  %v59 = vld [vmem:[%s0 + $0x128] sm:$0xff]
  %v60 = vld [vmem:[%s0 + $0x130] sm:$0xff]
  %v61 = vld [vmem:[%s0 + $0x138] sm:$0xff]
  %v62 = vld [vmem:[%s0 + $0x140] sm:$0xff]
  %v63 = vld [vmem:[%s0 + $0x148] sm:$0xff]
  %v64 = vld [vmem:[%s0 + $0x150] sm:$0xff]
  %v65 = vld [vmem:[%s0 + $0x158] sm:$0xff]
  %v66 = vld [vmem:[%s0 + $0x160] sm:$0xff]
  %v67 = vld [vmem:[%s0 + $0x168] sm:$0xff]
  %v68 = vld [vmem:[%s0 + $0x170] sm:$0xff]
  %v69 = vld [vmem:[%s0 + $0x178] sm:$0xff]
  %v70 = vld [vmem:[%s0 + $0x180] sm:$0xff]
  %v71 = vld [vmem:[%s0 + $0x188] sm:$0xff]
  %v72 = vld [vmem:[%s0 + $0x190] sm:$0xff]
  %v73 = vld [vmem:[%s0 + $0x198] sm:$0xff]
  %v74 = vld [vmem:[%s0 + $0x1a0] sm:$0xff]
  %v75 = vld [vmem:[%s0 + $0x1a8] sm:$0xff]
  %v76 = vld [vmem:[%s0 + $0x1b0] sm:$0xff]
  %v77 = vld [vmem:[%s0 + $0x1b8] sm:$0xff]
  %v78 = vld [vmem:[%s0 + $0x1c0] sm:$0xff]
  %v79 = vld [vmem:[%s0 + $0x1c8] sm:$0xff]
  %v80 = vld [vmem:[%s0 + $0x1d0] sm:$0xff]
  %v81 = vld [vmem:[%s0 + $0x1d8] sm:$0xff]
  %v82 = vld [vmem:[%s0 + $0x1e0] sm:$0xff]
  %v83 = vld [vmem:[%s0 + $0x1e8] sm:$0xff]
  %v84 = vld [vmem:[%s0 + $0x1f0] sm:$0xff]
  %v85 = vld [vmem:[%s0 + $0x1f8] sm:$0xff]
  %v86 = vld [vmem:[%s0 + $0x200] sm:$0xff]
  %v87 = vld [vmem:[%s0 + $0x208] sm:$0xff]
  %v88 = vld [vmem:[%s0 + $0x210] sm:$0xff]
  %v89 = vld [vmem:[%s0 + $0x218] sm:$0xff]
  %v90 = vld [vmem:[%s0 + $0x220] sm:$0xff]
  %v91 = vld [vmem:[%s0 + $0x228] sm:$0xff]
  %v92 = vld [vmem:[%s0 + $0x230] sm:$0xff]
  %v93 = vld [vmem:[%s0 + $0x238] sm:$0xff]
  %v94 = vld [vmem:[%s0 + $0x240] sm:$0xff]
  %v95 = vld [vmem:[%s0 + $0x248] sm:$0xff]
  %v96 = vld [vmem:[%s0 + $0x250] sm:$0xff]
  %v97 = vld [vmem:[%s0 + $0x258] sm:$0xff]
  %v98 = vld [vmem:[%s0 + $0x260] sm:$0xff]
  %v99 = vld [vmem:[%s0 + $0x268] sm:$0xff]
  %v100 = vld [vmem:[%s0 + $0x270] sm:$0xff]
  %v101 = vld [vmem:[%s0 + $0x278] sm:$0xff]
  %v102 = vld [vmem:[%s0 + $0x280] sm:$0xff]
  %v103 = vld [vmem:[%s0 + $0x288] sm:$0xff]
  %v104 = vld [vmem:[%s0 + $0x290] sm:$0xff]
  %v105 = vld [vmem:[%s0 + $0x298] sm:$0xff]
  %v106 = vld [vmem:[%s0 + $0x2a0] sm:$0xff]
  %v107 = vld [vmem:[%s0 + $0x2a8] sm:$0xff]
  %v108 = vld [vmem:[%s0 + $0x2b0] sm:$0xff]
  %v109 = vld [vmem:[%s0 + $0x2b8] sm:$0xff]
  %v110 = vld [vmem:[%s0 + $0x2c0] sm:$0xff]
  %v111 = vld [vmem:[%s0 + $0x2c8] sm:$0xff]
  %v112 = vld [vmem:[%s0 + $0x2d0] sm:$0xff]
  %v113 = vld [vmem:[%s0 + $0x2d8] sm:$0xff]
  %v114 = vld [vmem:[%s0 + $0x2e0] sm:$0xff]
  %v115 = vld [vmem:[%s0 + $0x2e8] sm:$0xff]
  %v116 = vld [vmem:[%s0 + $0x2f0] sm:$0xff]
  %v117 = vld [vmem:[%s0 + $0x2f8] sm:$0xff]
  %v118 = vld [vmem:[%s0 + $0x300] sm:$0xff]
  %v119 = vld [vmem:[%s0 + $0x308] sm:$0xff]
  %v120 = vld [vmem:[%s0 + $0x310] sm:$0xff]
  %v121 = vld [vmem:[%s0 + $0x318] sm:$0xff]
  %v122 = vld [vmem:[%s0 + $0x320] sm:$0xff]
  %v123 = vld [vmem:[%s0 + $0x328] sm:$0xff]
  %v124 = vld [vmem:[%s0 + $0x330] sm:$0xff]
  %v125 = vld [vmem:[%s0 + $0x338] sm:$0xff]
  %v126 = vld [vmem:[%s0 + $0x340] sm:$0xff]
  %v127 = vld [vmem:[%s0 + $0x348] sm:$0xff]
  %v128 = vld [vmem:[%s0 + $0x350] sm:$0xff]
  %v129 = vld [vmem:[%s0 + $0x358] sm:$0xff]
  %v130 = vld [vmem:[%s0 + $0x360] sm:$0xff]
  %v131 = vld [vmem:[%s0 + $0x368] sm:$0xff]
  %v132 = vld [vmem:[%s0 + $0x370] sm:$0xff]
  %v133 = vld [vmem:[%s0 + $0x378] sm:$0xff]
  %v134 = vld [vmem:[%s0 + $0x380] sm:$0xff]
  %v135 = vld [vmem:[%s0 + $0x388] sm:$0xff]
  %v136 = vld [vmem:[%s0 + $0x390] sm:$0xff]
  %v137 = vld [vmem:[%s0 + $0x398] sm:$0xff]
  %v138 = vld [vmem:[%s0 + $0x3a0] sm:$0xff]
  %v139 = vld [vmem:[%s0 + $0x3a8] sm:$0xff]
  %v140 = vld [vmem:[%s0 + $0x3b0] sm:$0xff]
  %v141 = vld [vmem:[%s0 + $0x3b8] sm:$0xff]
  %v142 = vld [vmem:[%s0 + $0x3c0] sm:$0xff]
  %v143 = vld [vmem:[%s0 + $0x3c8] sm:$0xff]
  %v144 = vld [vmem:[%s0 + $0x3d0] sm:$0xff]
  %v145 = vld [vmem:[%s0 + $0x3d8] sm:$0xff]
  %v146 = vld [vmem:[%s0 + $0x3e0] sm:$0xff]
  %v147 = vld [vmem:[%s0 + $0x3e8] sm:$0xff]
  %v148 = vld [vmem:[%s0 + $0x3f0] sm:$0xff]
  %v149 = vld [vmem:[%s0 + $0x3f8] sm:$0xff]
  %v150 = vld [vmem:[%s0 + $0x400] sm:$0xff]
  %v151 = vld [vmem:[%s0 + $0x408] sm:$0xff]
  %v152 = vld [vmem:[%s0 + $0x410] sm:$0xff]
  %v153 = vld [vmem:[%s0 + $0x418] sm:$0xff]
  %v154 = vld [vmem:[%s0 + $0x420] sm:$0xff]
  %v155 = vld [vmem:[%s0 + $0x428] sm:$0xff]
  %v156 = vld [vmem:[%s0 + $0x430] sm:$0xff]
  %v157 = vld [vmem:[%s0 + $0x438] sm:$0xff]
  %v158 = vld [vmem:[%s0 + $0x440] sm:$0xff]
  %v159 = vld [vmem:[%s0 + $0x448] sm:$0xff]
  %v160 = vld [vmem:[%s0 + $0x450] sm:$0xff]
  %v161 = vld [vmem:[%s0 + $0x458] sm:$0xff]
  %v162 = vld [vmem:[%s0 + $0x460] sm:$0xff]
  %v163 = vld [vmem:[%s0 + $0x468] sm:$0xff]
  %v164 = vld [vmem:[%s0 + $0x470] sm:$0xff]
  %v165 = vld [vmem:[%s0 + $0x478] sm:$0xff]
  %v166 = vld [vmem:[%s0 + $0x480] sm:$0xff]
  %v167 = vld [vmem:[%s0 + $0x488] sm:$0xff]
  %v168 = vld [vmem:[%s0 + $0x490] sm:$0xff]
  %v169 = vld [vmem:[%s0 + $0x498] sm:$0xff]
  %v170 = vld [vmem:[%s0 + $0x4a0] sm:$0xff]
  %v171 = vld [vmem:[%s0 + $0x4a8] sm:$0xff]
  %v172 = vld [vmem:[%s0 + $0x4b0] sm:$0xff]
  %v173 = vld [vmem:[%s0 + $0x4b8] sm:$0xff]
  %v174 = vld [vmem:[%s0 + $0x4c0] sm:$0xff]
  %v175 = vld [vmem:[%s0 + $0x4c8] sm:$0xff]
  %v176 = vld [vmem:[%s0 + $0x4d0] sm:$0xff]
  %v177 = vld [vmem:[%s0 + $0x4d8] sm:$0xff]
  %v178 = vld [vmem:[%s0 + $0x4e0] sm:$0xff]
  %v179 = vld [vmem:[%s0 + $0x4e8] sm:$0xff]
  %v180 = vld [vmem:[%s0 + $0x4f0] sm:$0xff]
  %v181 = vld [vmem:[%s0 + $0x4f8] sm:$0xff]
  %v182 = vld [vmem:[%s0 + $0x500] sm:$0xff]
  %v183 = vld [vmem:[%s0 + $0x508] sm:$0xff]
  %v184 = vld [vmem:[%s0 + $0x510] sm:$0xff]
  %v185 = vld [vmem:[%s0 + $0x518] sm:$0xff]
  %v186 = vld [vmem:[%s0 + $0x520] sm:$0xff]
  %v187 = vld [vmem:[%s0 + $0x528] sm:$0xff]
  %v188 = vld [vmem:[%s0 + $0x530] sm:$0xff]
  %v189 = vld [vmem:[%s0 + $0x538] sm:$0xff]
  %v190 = vld [vmem:[%s0 + $0x540] sm:$0xff]
  %v191 = vld [vmem:[%s0 + $0x548] sm:$0xff]
  %v192 = vld [vmem:[%s0 + $0x550] sm:$0xff]
  %v193 = vld [vmem:[%s0 + $0x558] sm:$0xff]
  %v194 = vld [vmem:[%s0 + $0x560] sm:$0xff]
  %v195 = vld [vmem:[%s0 + $0x568] sm:$0xff]
  %v196 = vld [vmem:[%s0 + $0x570] sm:$0xff]
  %v197 = vld [vmem:[%s0 + $0x578] sm:$0xff]
  %v198 = vld [vmem:[%s0 + $0x580] sm:$0xff]
  %v199 = vld [vmem:[%s0 + $0x588] sm:$0xff]
  %v200 = vld [vmem:[%s0 + $0x590] sm:$0xff]
  %v201 = vld [vmem:[%s0 + $0x598] sm:$0xff]
  %v202 = vld [vmem:[%s0 + $0x5a0] sm:$0xff]
  %v203 = vld [vmem:[%s0 + $0x5a8] sm:$0xff]
  %v204 = vld [vmem:[%s0 + $0x5b0] sm:$0xff]
  %v205 = vld [vmem:[%s0 + $0x5b8] sm:$0xff]
  %v206 = vld [vmem:[%s0 + $0x5c0] sm:$0xff]
  %v207 = vld [vmem:[%s0 + $0x5c8] sm:$0xff]
  %v208 = vld [vmem:[%s0 + $0x5d0] sm:$0xff]
  %v209 = vld [vmem:[%s0 + $0x5d8] sm:$0xff]
  %v210 = vld [vmem:[%s0 + $0x5e0] sm:$0xff]
  %v211 = vld [vmem:[%s0 + $0x5e8] sm:$0xff]
  %v212 = vld [vmem:[%s0 + $0x5f0] sm:$0xff]
  %v213 = vld [vmem:[%s0 + $0x5f8] sm:$0xff]
  %v214 = vld [vmem:[%s0 + $0x600] sm:$0xff]
  %v215 = vld [vmem:[%s0 + $0x608] sm:$0xff]
  %v216 = vld [vmem:[%s0 + $0x610] sm:$0xff]
  %v217 = vld [vmem:[%s0 + $0x618] sm:$0xff]
  %v218 = vld [vmem:[%s0 + $0x620] sm:$0xff]
  %v219 = vld [vmem:[%s0 + $0x628] sm:$0xff]
  %v220 = vld [vmem:[%s0 + $0x630] sm:$0xff]
  %v221 = vld [vmem:[%s0 + $0x638] sm:$0xff]
  %v222 = vld [vmem:[%s0 + $0x640] sm:$0xff]
  %v223 = vld [vmem:[%s0 + $0x648] sm:$0xff]
  %v224 = vld [vmem:[%s0 + $0x650] sm:$0xff]
  %v225 = vld [vmem:[%s0 + $0x658] sm:$0xff]
  %v226 = vld [vmem:[%s0 + $0x660] sm:$0xff]
  %v227 = vld [vmem:[%s0 + $0x668] sm:$0xff]
  %v228 = vld [vmem:[%s0 + $0x670] sm:$0xff]
  %v229 = vld [vmem:[%s0 + $0x678] sm:$0xff]
  %v230 = vld [vmem:[%s0 + $0x680] sm:$0xff]
  %v231 = vld [vmem:[%s0 + $0x688] sm:$0xff]
  %v232 = vld [vmem:[%s0 + $0x690] sm:$0xff]
  %v233 = vld [vmem:[%s0 + $0x698] sm:$0xff]
  %v234 = vld [vmem:[%s0 + $0x6a0] sm:$0xff]
  %v235 = vld [vmem:[%s0 + $0x6a8] sm:$0xff]
  %v236 = vld [vmem:[%s0 + $0x6b0] sm:$0xff]
  %v237 = vld [vmem:[%s0 + $0x6b8] sm:$0xff]
  %v238 = vld [vmem:[%s0 + $0x6c0] sm:$0xff]
  %v239 = vld [vmem:[%s0 + $0x6c8] sm:$0xff]
  %v240 = vld [vmem:[%s0 + $0x6d0] sm:$0xff]
  %v241 = vld [vmem:[%s0 + $0x6d8] sm:$0xff]
  %v242 = vld [vmem:[%s0 + $0x6e0] sm:$0xff]
  %v243 = vld [vmem:[%s0 + $0x6e8] sm:$0xff]
  %v244 = vld [vmem:[%s0 + $0x6f0] sm:$0xff]
  %v245 = vld [vmem:[%s0 + $0x6f8] sm:$0xff]
  %v246 = vld [vmem:[%s0 + $0x700] sm:$0xff]
  %v247 = vld [vmem:[%s0 + $0x708] sm:$0xff]
  %v248 = vld [vmem:[%s0 + $0x710] sm:$0xff]
  %v249 = vld [vmem:[%s0 + $0x718] sm:$0xff]
  %v250 = vld [vmem:[%s0 + $0x720] sm:$0xff]
  %v251 = vld [vmem:[%s0 + $0x728] sm:$0xff]
  %v252 = vld [vmem:[%s0 + $0x730] sm:$0xff]
  %v253 = vld [vmem:[%s0 + $0x738] sm:$0xff]
  %v254 = vld [vmem:[%s0 + $0x740] sm:$0xff]
  %v255 = vld [vmem:[%s0 + $0x748] sm:$0xff]
  %v256 = vld [vmem:[%s0 + $0x750] sm:$0xff]
  %v257 = vld [vmem:[%s0 + $0x758] sm:$0xff]
  %v258 = vld [vmem:[%s0 + $0x760] sm:$0xff]
  %v259 = vld [vmem:[%s0 + $0x768] sm:$0xff]
  %v260 = vld [vmem:[%s0 + $0x770] sm:$0xff]
  %v261 = vld [vmem:[%s0 + $0x778] sm:$0xff]
  %v262 = vld [vmem:[%s0 + $0x780] sm:$0xff]
  %v263 = vld [vmem:[%s0 + $0x788] sm:$0xff]
  %v264 = vld [vmem:[%s0 + $0x790] sm:$0xff]
  %v265 = vld [vmem:[%s0 + $0x798] sm:$0xff]
  %v266 = vld [vmem:[%s0 + $0x7a0] sm:$0xff]
  %v267 = vld [vmem:[%s0 + $0x7a8] sm:$0xff]
  %v268 = vld [vmem:[%s0 + $0x7b0] sm:$0xff]
  %v269 = vld [vmem:[%s0 + $0x7b8] sm:$0xff]
  %v270 = vld [vmem:[%s0 + $0x7c0] sm:$0xff]
  %v271 = vld [vmem:[%s0 + $0x7c8] sm:$0xff]
  %v272 = vld [vmem:[%s0 + $0x7d0] sm:$0xff]
  %v273 = vld [vmem:[%s0 + $0x7d8] sm:$0xff]
  %v274 = vld [vmem:[%s0 + $0x7e0] sm:$0xff]
  %v275 = vld [vmem:[%s0 + $0x7e8] sm:$0xff]
  %v276 = vld [vmem:[%s0 + $0x7f0] sm:$0xff]
  %v277 = vld [vmem:[%s0 + $0x7f8] sm:$0xff]
  %v278 = vld [vmem:[%s0 + $0x800] sm:$0xff]
  %v279 = vld [vmem:[%s0 + $0x808] sm:$0xff]
  %v280 = vld [vmem:[%s0 + $0x810] sm:$0xff]
  %v281 = vld [vmem:[%s0 + $0x818] sm:$0xff]
  %v282 = vld [vmem:[%s0 + $0x820] sm:$0xff]
  %v283 = vld [vmem:[%s0 + $0x828] sm:$0xff]
  %v284 = vld [vmem:[%s0 + $0x830] sm:$0xff]
  %v285 = vld [vmem:[%s0 + $0x838] sm:$0xff]
  %v286 = vld [vmem:[%s0 + $0x840] sm:$0xff]
  %v287 = vld [vmem:[%s0 + $0x848] sm:$0xff]
  %v288 = vld [vmem:[%s0 + $0x850] sm:$0xff]
  %v289 = vld [vmem:[%s0 + $0x858] sm:$0xff]
  %v290 = vld [vmem:[%s0 + $0x860] sm:$0xff]
  %v291 = vld [vmem:[%s0 + $0x868] sm:$0xff]
  %v292 = vld [vmem:[%s0 + $0x870] sm:$0xff]
  %v293 = vld [vmem:[%s0 + $0x878] sm:$0xff]
  %v294 = vld [vmem:[%s0 + $0x880] sm:$0xff]
  %v295 = vld [vmem:[%s0 + $0x888] sm:$0xff]
  %v296 = vld [vmem:[%s0 + $0x890] sm:$0xff]
  %v297 = vld [vmem:[%s0 + $0x898] sm:$0xff]
  %v298 = vld [vmem:[%s0 + $0x8a0] sm:$0xff]
  %v299 = vld [vmem:[%s0 + $0x8a8] sm:$0xff]
  %v300 = vld [vmem:[%s0 + $0x8b0] sm:$0xff]
  %v301 = vld [vmem:[%s0 + $0x8b8] sm:$0xff]
  %v302 = vld [vmem:[%s0 + $0x8c0] sm:$0xff]
  %v303 = vld [vmem:[%s0 + $0x8c8] sm:$0xff]
  %v304 = vld [vmem:[%s0 + $0x8d0] sm:$0xff]
  %v305 = vld [vmem:[%s0 + $0x8d8] sm:$0xff]
  %v306 = vld [vmem:[%s0 + $0x8e0] sm:$0xff]
  %v307 = vld [vmem:[%s0 + $0x8e8] sm:$0xff]
  %v308 = vld [vmem:[%s0 + $0x8f0] sm:$0xff]
  %v309 = vld [vmem:[%s0 + $0x8f8] sm:$0xff]
  %v310 = vld [vmem:[%s0 + $0x900] sm:$0xff]
  %v311 = vld [vmem:[%s0 + $0x908] sm:$0xff]
  %v312 = vld [vmem:[%s0 + $0x910] sm:$0xff]
  %v313 = vld [vmem:[%s0 + $0x918] sm:$0xff]
  %v314 = vld [vmem:[%s0 + $0x920] sm:$0xff]
  %v315 = vld [vmem:[%s0 + $0x928] sm:$0xff]
  %v316 = vld [vmem:[%s0 + $0x930] sm:$0xff]
  %v317 = vld [vmem:[%s0 + $0x938] sm:$0xff]
  %v318 = vld [vmem:[%s0 + $0x940] sm:$0xff]
  %v319 = vld [vmem:[%s0 + $0x948] sm:$0xff]
  %v320 = vld [vmem:[%s0 + $0x950] sm:$0xff]
  %v321 = vld [vmem:[%s0 + $0x958] sm:$0xff]
  %v322 = vld [vmem:[%s0 + $0x960] sm:$0xff]
  %v323 = vld [vmem:[%s0 + $0x968] sm:$0xff]
  %v324 = vld [vmem:[%s0 + $0x970] sm:$0xff]
  %v325 = vld [vmem:[%s0 + $0x978] sm:$0xff]
  %v326 = vld [vmem:[%s0 + $0x980] sm:$0xff]
  %v327 = vld [vmem:[%s0 + $0x988] sm:$0xff]
  %v328 = vld [vmem:[%s0 + $0x990] sm:$0xff]
  %v329 = vld [vmem:[%s0 + $0x998] sm:$0xff]
  %v330 = vld [vmem:[%s0 + $0x9a0] sm:$0xff]
  %v331 = vld [vmem:[%s0 + $0x9a8] sm:$0xff]
  %v332 = vld [vmem:[%s0 + $0x9b0] sm:$0xff]
  %v333 = vld [vmem:[%s0 + $0x9b8] sm:$0xff]
  %v334 = vld [vmem:[%s0 + $0x9c0] sm:$0xff]
  %v335 = vld [vmem:[%s0 + $0x9c8] sm:$0xff]
  %v336 = vld [vmem:[%s0 + $0x9d0] sm:$0xff]
  %v337 = vld [vmem:[%s0 + $0x9d8] sm:$0xff]
  %v338 = vld [vmem:[%s0 + $0x9e0] sm:$0xff]
  %v339 = vld [vmem:[%s0 + $0x9e8] sm:$0xff]
  %v340 = vld [vmem:[%s0 + $0x9f0] sm:$0xff]
  %v341 = vld [vmem:[%s0 + $0x9f8] sm:$0xff]
  %v342 = vld [vmem:[%s0 + $0xa00] sm:$0xff]
  %v343 = vld [vmem:[%s0 + $0xa08] sm:$0xff]
  %v344 = vld [vmem:[%s0 + $0xa10] sm:$0xff]
  %v345 = vld [vmem:[%s0 + $0xa18] sm:$0xff]
  %v346 = vld [vmem:[%s0 + $0xa20] sm:$0xff]
  %v347 = vld [vmem:[%s0 + $0xa28] sm:$0xff]
  %v348 = vld [vmem:[%s0 + $0xa30] sm:$0xff]
  %v349 = vld [vmem:[%s0 + $0xa38] sm:$0xff]
  %v350 = vld [vmem:[%s0 + $0xa40] sm:$0xff]
  %v351 = vld [vmem:[%s0 + $0xa48] sm:$0xff]
  %v352 = vld [vmem:[%s0 + $0xa50] sm:$0xff]
  %v353 = vld [vmem:[%s0 + $0xa58] sm:$0xff]
  %v354 = vld [vmem:[%s0 + $0xa60] sm:$0xff]
  %v355 = vld [vmem:[%s0 + $0xa68] sm:$0xff]
  %v356 = vld [vmem:[%s0 + $0xa70] sm:$0xff]
  %v357 = vld [vmem:[%s0 + $0xa78] sm:$0xff]
  %v358 = vld [vmem:[%s0 + $0xa80] sm:$0xff]
  %v359 = vld [vmem:[%s0 + $0xa88] sm:$0xff]
  %v360 = vld [vmem:[%s0 + $0xa90] sm:$0xff]
  %v361 = vld [vmem:[%s0 + $0xa98] sm:$0xff]
  %v362 = vld [vmem:[%s0 + $0xaa0] sm:$0xff]
  %v363 = vld [vmem:[%s0 + $0xaa8] sm:$0xff]
  %v364 = vld [vmem:[%s0 + $0xab0] sm:$0xff]
  %v365 = vld [vmem:[%s0 + $0xab8] sm:$0xff]
  %v366 = vld [vmem:[%s0 + $0xac0] sm:$0xff]
  %v367 = vld [vmem:[%s0 + $0xac8] sm:$0xff]
  %v368 = vld [vmem:[%s0 + $0xad0] sm:$0xff]
  %v369 = vld [vmem:[%s0 + $0xad8] sm:$0xff]
  %v370 = vld [vmem:[%s0 + $0xae0] sm:$0xff]
  %v371 = vld [vmem:[%s0 + $0xae8] sm:$0xff]
  %v372 = vld [vmem:[%s0 + $0xaf0] sm:$0xff]
  %v373 = vld [vmem:[%s0 + $0xaf8] sm:$0xff]
  %v374 = vld [vmem:[%s0 + $0xb00] sm:$0xff]
  %v375 = vld [vmem:[%s0 + $0xb08] sm:$0xff]
  %v376 = vld [vmem:[%s0 + $0xb10] sm:$0xff]
  %v377 = vld [vmem:[%s0 + $0xb18] sm:$0xff]
  %v378 = vld [vmem:[%s0 + $0xb20] sm:$0xff]
  %v379 = vld [vmem:[%s0 + $0xb28] sm:$0xff]
  %v380 = vld [vmem:[%s0 + $0xb30] sm:$0xff]
  %v381 = vld [vmem:[%s0 + $0xb38] sm:$0xff]
  %v382 = vld [vmem:[%s0 + $0xb40] sm:$0xff]
  %v383 = vld [vmem:[%s0 + $0xb48] sm:$0xff]
  %v384 = vld [vmem:[%s0 + $0xb50] sm:$0xff]
  %v385 = vld [vmem:[%s0 + $0xb58] sm:$0xff]
  %v386 = vld [vmem:[%s0 + $0xb60] sm:$0xff]
  %v387 = vld [vmem:[%s0 + $0xb68] sm:$0xff]
  %v388 = vld [vmem:[%s0 + $0xb70] sm:$0xff]
  %v389 = vld [vmem:[%s0 + $0xb78] sm:$0xff]
  %v390 = vld [vmem:[%s0 + $0xb80] sm:$0xff]
  %v391 = vld [vmem:[%s0 + $0xb88] sm:$0xff]
  %v392 = vld [vmem:[%s0 + $0xb90] sm:$0xff]
  %v393 = vld [vmem:[%s0 + $0xb98] sm:$0xff]
  %v394 = vld [vmem:[%s0 + $0xba0] sm:$0xff]
  %v395 = vld [vmem:[%s0 + $0xba8] sm:$0xff]
  %v396 = vld [vmem:[%s0 + $0xbb0] sm:$0xff]
  %v397 = vld [vmem:[%s0 + $0xbb8] sm:$0xff]
  %v398 = vld [vmem:[%s0 + $0xbc0] sm:$0xff]
  %v399 = vld [vmem:[%s0 + $0xbc8] sm:$0xff]
  %v400 = vld [vmem:[%s0 + $0xbd0] sm:$0xff]
  %v401 = vld [vmem:[%s0 + $0xbd8] sm:$0xff]
  %v402 = vld [vmem:[%s0 + $0xbe0] sm:$0xff]
  %v403 = vld [vmem:[%s0 + $0xbe8] sm:$0xff]
  %v404 = vld [vmem:[%s0 + $0xbf0] sm:$0xff]
  %v405 = vld [vmem:[%s0 + $0xbf8] sm:$0xff]
  %v406 = vld [vmem:[%s0 + $0xc00] sm:$0xff]
  %v407 = vld [vmem:[%s0 + $0xc08] sm:$0xff]
  %v408 = vld [vmem:[%s0 + $0xc10] sm:$0xff]
  %v409 = vld [vmem:[%s0 + $0xc18] sm:$0xff]
  %v410 = vld [vmem:[%s0 + $0xc20] sm:$0xff]
  %v411 = vld [vmem:[%s0 + $0xc28] sm:$0xff]
  %v412 = vld [vmem:[%s0 + $0xc30] sm:$0xff]
  %v413 = vld [vmem:[%s0 + $0xc38] sm:$0xff]
  %v414 = vld [vmem:[%s0 + $0xc40] sm:$0xff]
  %v415 = vld [vmem:[%s0 + $0xc48] sm:$0xff]
  %v416 = vld [vmem:[%s0 + $0xc50] sm:$0xff]
  %v417 = vld [vmem:[%s0 + $0xc58] sm:$0xff]
  %v418 = vld [vmem:[%s0 + $0xc60] sm:$0xff]
  %v419 = vld [vmem:[%s0 + $0xc68] sm:$0xff]
  %v420 = vld [vmem:[%s0 + $0xc70] sm:$0xff]
  %v421 = vld [vmem:[%s0 + $0xc78] sm:$0xff]
  %v422 = vld [vmem:[%s0 + $0xc80] sm:$0xff]
  %v423 = vld [vmem:[%s0 + $0xc88] sm:$0xff]
  %v424 = vld [vmem:[%s0 + $0xc90] sm:$0xff]
  %v425 = vld [vmem:[%s0 + $0xc98] sm:$0xff]
  %v426 = vld [vmem:[%s0 + $0xca0] sm:$0xff]
  %v427 = vld [vmem:[%s0 + $0xca8] sm:$0xff]
  %v428 = vld [vmem:[%s0 + $0xcb0] sm:$0xff]
  %v429 = vld [vmem:[%s0 + $0xcb8] sm:$0xff]
  %v430 = vld [vmem:[%s0 + $0xcc0] sm:$0xff]
  %v431 = vld [vmem:[%s0 + $0xcc8] sm:$0xff]
  %v432 = vld [vmem:[%s0 + $0xcd0] sm:$0xff]
  %v433 = vld [vmem:[%s0 + $0xcd8] sm:$0xff]
  %v434 = vld [vmem:[%s0 + $0xce0] sm:$0xff]
  %v435 = vld [vmem:[%s0 + $0xce8] sm:$0xff]
  %v436 = vld [vmem:[%s0 + $0xcf0] sm:$0xff]
  %v437 = vld [vmem:[%s0 + $0xcf8] sm:$0xff]
  %v438 = vld [vmem:[%s0 + $0xd00] sm:$0xff]
  %v439 = vld [vmem:[%s0 + $0xd08] sm:$0xff]
  %v440 = vld [vmem:[%s0 + $0xd10] sm:$0xff]
  %v441 = vld [vmem:[%s0 + $0xd18] sm:$0xff]
  %v442 = vld [vmem:[%s0 + $0xd20] sm:$0xff]
  %v443 = vld [vmem:[%s0 + $0xd28] sm:$0xff]
  %v444 = vld [vmem:[%s0 + $0xd30] sm:$0xff]
  %v445 = vld [vmem:[%s0 + $0xd38] sm:$0xff]
  %v446 = vld [vmem:[%s0 + $0xd40] sm:$0xff]
  %v447 = vld [vmem:[%s0 + $0xd48] sm:$0xff]
  %v448 = vld [vmem:[%s0 + $0xd50] sm:$0xff]
  %v449 = vld [vmem:[%s0 + $0xd58] sm:$0xff]
  %v450 = vld [vmem:[%s0 + $0xd60] sm:$0xff]
  %v451 = vld [vmem:[%s0 + $0xd68] sm:$0xff]
  %v452 = vld [vmem:[%s0 + $0xd70] sm:$0xff]
  %v453 = vld [vmem:[%s0 + $0xd78] sm:$0xff]
  %v454 = vld [vmem:[%s0 + $0xd80] sm:$0xff]
  %v455 = vld [vmem:[%s0 + $0xd88] sm:$0xff]
  %v456 = vld [vmem:[%s0 + $0xd90] sm:$0xff]
  %v457 = vld [vmem:[%s0 + $0xd98] sm:$0xff]
  %v458 = vld [vmem:[%s0 + $0xda0] sm:$0xff]
  %v459 = vld [vmem:[%s0 + $0xda8] sm:$0xff]
  %v460 = vld [vmem:[%s0 + $0xdb0] sm:$0xff]
  %v461 = vld [vmem:[%s0 + $0xdb8] sm:$0xff]
  %v462 = vld [vmem:[%s0 + $0xdc0] sm:$0xff]
  %v463 = vld [vmem:[%s0 + $0xdc8] sm:$0xff]
  %v464 = vld [vmem:[%s0 + $0xdd0] sm:$0xff]
  %v465 = vld [vmem:[%s0 + $0xdd8] sm:$0xff]
  %v466 = vld [vmem:[%s0 + $0xde0] sm:$0xff]
  %v467 = vld [vmem:[%s0 + $0xde8] sm:$0xff]
  %v468 = vld [vmem:[%s0 + $0xdf0] sm:$0xff]
  %v469 = vld [vmem:[%s0 + $0xdf8] sm:$0xff]
  %v470 = vld [vmem:[%s0 + $0xe00] sm:$0xff]
  %v471 = vld [vmem:[%s0 + $0xe08] sm:$0xff]
  %v472 = vld [vmem:[%s0 + $0xe10] sm:$0xff]
  %v473 = vld [vmem:[%s0 + $0xe18] sm:$0xff]
  %v474 = vld [vmem:[%s0 + $0xe20] sm:$0xff]
  %v475 = vld [vmem:[%s0 + $0xe28] sm:$0xff]
  %v476 = vld [vmem:[%s0 + $0xe30] sm:$0xff]
  %v477 = vld [vmem:[%s0 + $0xe38] sm:$0xff]
  %v478 = vld [vmem:[%s0 + $0xe40] sm:$0xff]
  %v479 = vld [vmem:[%s0 + $0xe48] sm:$0xff]
  %v480 = vld [vmem:[%s0 + $0xe50] sm:$0xff]
  %v481 = vld [vmem:[%s0 + $0xe58] sm:$0xff]
  %v482 = vld [vmem:[%s0 + $0xe60] sm:$0xff]
  %v483 = vld [vmem:[%s0 + $0xe68] sm:$0xff]
  %v484 = vld [vmem:[%s0 + $0xe70] sm:$0xff]
  %v485 = vld [vmem:[%s0 + $0xe78] sm:$0xff]
  %v486 = vld [vmem:[%s0 + $0xe80] sm:$0xff]
  %v487 = vld [vmem:[%s0 + $0xe88] sm:$0xff]
  %v488 = vld [vmem:[%s0 + $0xe90] sm:$0xff]
  %v489 = vld [vmem:[%s0 + $0xe98] sm:$0xff]
  %v490 = vld [vmem:[%s0 + $0xea0] sm:$0xff]
  %v491 = vld [vmem:[%s0 + $0xea8] sm:$0xff]
  %v492 = vld [vmem:[%s0 + $0xeb0] sm:$0xff]
  %v493 = vld [vmem:[%s0 + $0xeb8] sm:$0xff]
  %v494 = vld [vmem:[%s0 + $0xec0] sm:$0xff]
  %v495 = vld [vmem:[%s0 + $0xec8] sm:$0xff]
  %v496 = vld [vmem:[%s0 + $0xed0] sm:$0xff]
  %v497 = vld [vmem:[%s0 + $0xed8] sm:$0xff]
  %v498 = vld [vmem:[%s0 + $0xee0] sm:$0xff]
  %v499 = vld [vmem:[%s0 + $0xee8] sm:$0xff]
  %v500 = vld [vmem:[%s0 + $0xef0] sm:$0xff]
  %v501 = vld [vmem:[%s0 + $0xef8] sm:$0xff]
  %v502 = vld [vmem:[%s0 + $0xf00] sm:$0xff]
  %v503 = vld [vmem:[%s0 + $0xf08] sm:$0xff]
  %v504 = vld [vmem:[%s0 + $0xf10] sm:$0xff]
  %v505 = vld [vmem:[%s0 + $0xf18] sm:$0xff]
  %v506 = vld [vmem:[%s0 + $0xf20] sm:$0xff]
  %v507 = vld [vmem:[%s0 + $0xf28] sm:$0xff]
  %v508 = vld [vmem:[%s0 + $0xf30] sm:$0xff]
  %v509 = vld [vmem:[%s0 + $0xf38] sm:$0xff]
  %v510 = vld [vmem:[%s0 + $0xf40] sm:$0xff]
  %v511 = vld [vmem:[%s0 + $0xf48] sm:$0xff]
  %v512 = vld [vmem:[%s0 + $0xf50] sm:$0xff]
  %v513 = vld [vmem:[%s0 + $0xf58] sm:$0xff]
  %v514 = vld [vmem:[%s0 + $0xf60] sm:$0xff]
  %v515 = vld [vmem:[%s0 + $0xf68] sm:$0xff]
  %v516 = vld [vmem:[%s0 + $0xf70] sm:$0xff]
  %v517 = vld [vmem:[%s0 + $0xf78] sm:$0xff]
  %v518 = vld [vmem:[%s0 + $0xf80] sm:$0xf]
  %v519 = vld [vmem:[%s0 + $0xf88] sm:$0xf]
  %v520 = vld [vmem:[%s0 + $0xf90] sm:$0xf]
  %v521 = vld [vmem:[%s0 + $0xf98] sm:$0xf]
  %v522 = vld [vmem:[%s0 + $0xfa0] sm:$0xf]
  %v523 = vld [vmem:[%s0 + $0xfa8] sm:$0xf]
  %v524 = vld [vmem:[%s0 + $0xfb0] sm:$0xf]
  %v525 = vld [vmem:[%s0 + $0xfb8] sm:$0xf]
  %v528 = vcombine.high %v20, %v20
  %v529 = vcombine.high %v21, %v21
  %vm531 = vcmask 949248
  %v532 = vsel %vm531, %v529, 0
  %vm534 = vcmask 1043456
  %v536 = vsel %vm534, %v518, 0
  %v539 = vsel %vm534, %v519, 0
  %v542 = vsel %vm534, %v520, 0
  %v545 = vsel %vm534, %v521, 0
  %v548 = vsel %vm534, %v522, 0
  %v551 = vsel %vm534, %v523, 0
  %v554 = vsel %vm534, %v524, 0
  %v557 = vsel %vm534, %v525, 0
  %559 = vmatprep.subr.mxu0 %v23
  %560 = vmatpush1.msra.mxu0 %v22
  %561 = vmatprep.subr.mxu0 %v31
  %562 = vmatpush1.msra.mxu0 %v30
  %563 = vmatprep.subr.mxu0 %v39
  %564 = vmatpush1.msra.mxu0 %v38
  %565 = vmatprep.subr.mxu0 %v47
  %566 = vmatpush1.msra.mxu0 %v46
  %567 = vmatprep.subr.mxu0 %v55
  %568 = vmatpush1.msra.mxu0 %v54
  %569 = vmatprep.subr.mxu0 %v63
  %570 = vmatpush1.msra.mxu0 %v62
  %571 = vmatprep.subr.mxu0 %v71
  %572 = vmatpush1.msra.mxu0 %v70
  %573 = vmatprep.subr.mxu0 %v79
  %574 = vmatpush1.msra.mxu0 %v78
  %575 = vmatprep.subr.mxu0 %v87
  %576 = vmatpush1.msra.mxu0 %v86
  %577 = vmatprep.subr.mxu0 %v95
  %578 = vmatpush1.msra.mxu0 %v94
  %579 = vmatprep.subr.mxu0 %v103
  %580 = vmatpush1.msra.mxu0 %v102
  %581 = vmatprep.subr.mxu0 %v111
  %582 = vmatpush1.msra.mxu0 %v110
  %583 = vmatprep.subr.mxu0 %v119
  %584 = vmatpush1.msra.mxu0 %v118
  %585 = vmatprep.subr.mxu0 %v127
  %586 = vmatpush1.msra.mxu0 %v126
  %587 = vmatprep.subr.mxu0 %v135
  %588 = vmatpush1.msra.mxu0 %v134
  %589 = vmatprep.subr.mxu0 %v143
  %590 = vmatpush1.msra.mxu0 %v142
  %591 = vmatprep.subr.mxu0 %v151
  %592 = vmatpush1.msra.mxu0 %v150
  %593 = vmatprep.subr.mxu0 %v159
  %594 = vmatpush1.msra.mxu0 %v158
  %595 = vmatprep.subr.mxu0 %v167
  %596 = vmatpush1.msra.mxu0 %v166
  %597 = vmatprep.subr.mxu0 %v175
  %598 = vmatpush1.msra.mxu0 %v174
  %599 = vmatprep.subr.mxu0 %v183
  %600 = vmatpush1.msra.mxu0 %v182
  %601 = vmatprep.subr.mxu0 %v191
  %602 = vmatpush1.msra.mxu0 %v190
  %603 = vmatprep.subr.mxu0 %v199
  %604 = vmatpush1.msra.mxu0 %v198
  %605 = vmatprep.subr.mxu0 %v207
  %606 = vmatpush1.msra.mxu0 %v206
  %607 = vmatprep.subr.mxu0 %v215
  %608 = vmatpush1.msra.mxu0 %v214
  %609 = vmatprep.subr.mxu0 %v223
  %610 = vmatpush1.msra.mxu0 %v222
  %611 = vmatprep.subr.mxu0 %v231
  %612 = vmatpush1.msra.mxu0 %v230
  %613 = vmatprep.subr.mxu0 %v239
  %614 = vmatpush1.msra.mxu0 %v238
  %615 = vmatprep.subr.mxu0 %v247
  %616 = vmatpush1.msra.mxu0 %v246
  %617 = vmatprep.subr.mxu0 %v255
  %618 = vmatpush1.msra.mxu0 %v254
  %619 = vmatprep.subr.mxu0 %v263
  %620 = vmatpush1.msra.mxu0 %v262
  %621 = vmatprep.subr.mxu0 %v271
  %622 = vmatpush1.msra.mxu0 %v270
  %623 = vmatprep.mubr.f32.mxu0 %v528
  %624 = vmatmul.mubr.f32.gmra.mrb[0].mxu0 %v20
  %v625 = vpop.f32.mrb[0].mxu0
  %v626 = vadd.f32 0.0, %v625
  %v627 = vpop.f32.mrb[0].mxu0
  %v628 = vadd.f32 0.0, %v627
  %629 = vdwg.mxu0
  %630 = vmatprep.subr.mxu0 %v279
  %631 = vmatpush1.msra.mxu0 %v278
  %632 = vmatprep.subr.mxu0 %v287
  %633 = vmatpush1.msra.mxu0 %v286
  %634 = vmatprep.subr.mxu0 %v295
  %635 = vmatpush1.msra.mxu0 %v294
  %636 = vmatprep.subr.mxu0 %v303
  %637 = vmatpush1.msra.mxu0 %v302
  %638 = vmatprep.subr.mxu0 %v311
  %639 = vmatpush1.msra.mxu0 %v310
  %640 = vmatprep.subr.mxu0 %v319
  %641 = vmatpush1.msra.mxu0 %v318
  %642 = vmatprep.subr.mxu0 %v327
  %643 = vmatpush1.msra.mxu0 %v326
  %644 = vmatprep.subr.mxu0 %v335
  %645 = vmatpush1.msra.mxu0 %v334
  %646 = vmatprep.subr.mxu0 %v343
  %647 = vmatpush1.msra.mxu0 %v342
  %648 = vmatprep.subr.mxu0 %v351
  %649 = vmatpush1.msra.mxu0 %v350
  %650 = vmatprep.subr.mxu0 %v359
  %651 = vmatpush1.msra.mxu0 %v358
  %652 = vmatprep.subr.mxu0 %v367
  %653 = vmatpush1.msra.mxu0 %v366
  %654 = vmatprep.subr.mxu0 %v375
  %655 = vmatpush1.msra.mxu0 %v374
  %656 = vmatprep.subr.mxu0 %v383
  %657 = vmatpush1.msra.mxu0 %v382
  %658 = vmatprep.subr.mxu0 %v391
  %659 = vmatpush1.msra.mxu0 %v390
  %660 = vmatprep.subr.mxu0 %v399
  %661 = vmatpush1.msra.mxu0 %v398
  %662 = vmatprep.subr.mxu0 %v407
  %663 = vmatpush1.msra.mxu0 %v406
  %664 = vmatprep.subr.mxu0 %v415
  %665 = vmatpush1.msra.mxu0 %v414
  %666 = vmatprep.subr.mxu0 %v423
  %667 = vmatpush1.msra.mxu0 %v422
  %668 = vmatprep.subr.mxu0 %v431
  %669 = vmatpush1.msra.mxu0 %v430
  %670 = vmatprep.subr.mxu0 %v439
  %671 = vmatpush1.msra.mxu0 %v438
  %672 = vmatprep.subr.mxu0 %v447
  %673 = vmatpush1.msra.mxu0 %v446
  %674 = vmatprep.subr.mxu0 %v455
  %675 = vmatpush1.msra.mxu0 %v454
  %676 = vmatprep.subr.mxu0 %v463
  %677 = vmatpush1.msra.mxu0 %v462
  %678 = vmatprep.subr.mxu0 %v471
  %679 = vmatpush1.msra.mxu0 %v470
  %680 = vmatprep.subr.mxu0 %v479
  %681 = vmatpush1.msra.mxu0 %v478
  %682 = vmatprep.subr.mxu0 %v487
  %683 = vmatpush1.msra.mxu0 %v486
  %684 = vmatprep.subr.mxu0 %v495
  %685 = vmatpush1.msra.mxu0 %v494
  %686 = vmatprep.subr.mxu0 %v503
  %687 = vmatpush1.msra.mxu0 %v502
  %688 = vmatprep.subr.mxu0 %v511
  %689 = vmatpush1.msra.mxu0 %v510
  %690 = vmatprep.subr.mxu0 %v539
  %691 = vmatpush1.msra.mxu0 %v536
  %692 = vmatprep.subr.mxu0 0.0
  %693 = vmatpush1.msra.mxu0 0.0
  %694 = vmatprep.mubr.f32.mxu0 %v532
  %695 = vmatmul.mubr.f32.gmra.mrb[0].mxu0 %v21
  %v696 = vpop.f32.mrb[0].mxu0
  %v697 = vadd.f32 %v626, %v696
  %v698 = vpop.f32.mrb[0].mxu0
  %v699 = vadd.f32 %v628, %v698
  %700 = vdwg.mxu0
  %701 = vmatprep.subr.mxu0 %v25
  %702 = vmatpush1.msra.mxu0 %v24
  %703 = vmatprep.subr.mxu0 %v33
  %704 = vmatpush1.msra.mxu0 %v32
  %705 = vmatprep.subr.mxu0 %v41
  %706 = vmatpush1.msra.mxu0 %v40
  %707 = vmatprep.subr.mxu0 %v49
  %708 = vmatpush1.msra.mxu0 %v48
  %709 = vmatprep.subr.mxu0 %v57
  %710 = vmatpush1.msra.mxu0 %v56
  %711 = vmatprep.subr.mxu0 %v65
  %712 = vmatpush1.msra.mxu0 %v64
  %713 = vmatprep.subr.mxu0 %v73
  %714 = vmatpush1.msra.mxu0 %v72
  %715 = vmatprep.subr.mxu0 %v81
  %716 = vmatpush1.msra.mxu0 %v80
  %717 = vmatprep.subr.mxu0 %v89
  %718 = vmatpush1.msra.mxu0 %v88
  %719 = vmatprep.subr.mxu0 %v97
  %720 = vmatpush1.msra.mxu0 %v96
  %721 = vmatprep.subr.mxu0 %v105
  %722 = vmatpush1.msra.mxu0 %v104
  %723 = vmatprep.subr.mxu0 %v113
  %724 = vmatpush1.msra.mxu0 %v112
  %725 = vmatprep.subr.mxu0 %v121
  %726 = vmatpush1.msra.mxu0 %v120
  %727 = vmatprep.subr.mxu0 %v129
  %728 = vmatpush1.msra.mxu0 %v128
  %729 = vmatprep.subr.mxu0 %v137
  %730 = vmatpush1.msra.mxu0 %v136
  %731 = vmatprep.subr.mxu0 %v145
  %732 = vmatpush1.msra.mxu0 %v144
  %733 = vmatprep.subr.mxu0 %v153
  %734 = vmatpush1.msra.mxu0 %v152
  %735 = vmatprep.subr.mxu0 %v161
  %736 = vmatpush1.msra.mxu0 %v160
  %737 = vmatprep.subr.mxu0 %v169
  %738 = vmatpush1.msra.mxu0 %v168
  %739 = vmatprep.subr.mxu0 %v177
  %740 = vmatpush1.msra.mxu0 %v176
  %741 = vmatprep.subr.mxu0 %v185
  %742 = vmatpush1.msra.mxu0 %v184
  %743 = vmatprep.subr.mxu0 %v193
  %744 = vmatpush1.msra.mxu0 %v192
  %745 = vmatprep.subr.mxu0 %v201
  %746 = vmatpush1.msra.mxu0 %v200
  %747 = vmatprep.subr.mxu0 %v209
  %748 = vmatpush1.msra.mxu0 %v208
  %749 = vmatprep.subr.mxu0 %v217
  %750 = vmatpush1.msra.mxu0 %v216
  %751 = vmatprep.subr.mxu0 %v225
  %752 = vmatpush1.msra.mxu0 %v224
  %753 = vmatprep.subr.mxu0 %v233
  %754 = vmatpush1.msra.mxu0 %v232
  %755 = vmatprep.subr.mxu0 %v241
  %756 = vmatpush1.msra.mxu0 %v240
  %757 = vmatprep.subr.mxu0 %v249
  %758 = vmatpush1.msra.mxu0 %v248
  %759 = vmatprep.subr.mxu0 %v257
  %760 = vmatpush1.msra.mxu0 %v256
  %761 = vmatprep.subr.mxu0 %v265
  %762 = vmatpush1.msra.mxu0 %v264
  %763 = vmatprep.subr.mxu0 %v273
  %764 = vmatpush1.msra.mxu0 %v272
  %765 = vmatprep.mubr.f32.mxu0 %v528
  %766 = vmatmul.mubr.f32.gmra.mrb[0].mxu0 %v20
  %v767 = vpop.f32.mrb[0].mxu0
  %v768 = vadd.f32 0.0, %v767
  %v769 = vpop.f32.mrb[0].mxu0
  %v770 = vadd.f32 0.0, %v769
  %771 = vdwg.mxu0
  %772 = vmatprep.subr.mxu0 %v281
  %773 = vmatpush1.msra.mxu0 %v280
  %774 = vmatprep.subr.mxu0 %v289
  %775 = vmatpush1.msra.mxu0 %v288
  %776 = vmatprep.subr.mxu0 %v297
  %777 = vmatpush1.msra.mxu0 %v296
  %778 = vmatprep.subr.mxu0 %v305
  %779 = vmatpush1.msra.mxu0 %v304
  %780 = vmatprep.subr.mxu0 %v313
  %781 = vmatpush1.msra.mxu0 %v312
  %782 = vmatprep.subr.mxu0 %v321
  %783 = vmatpush1.msra.mxu0 %v320
  %784 = vmatprep.subr.mxu0 %v329
  %785 = vmatpush1.msra.mxu0 %v328
  %786 = vmatprep.subr.mxu0 %v337
  %787 = vmatpush1.msra.mxu0 %v336
  %788 = vmatprep.subr.mxu0 %v345
  %789 = vmatpush1.msra.mxu0 %v344
  %790 = vmatprep.subr.mxu0 %v353
  %791 = vmatpush1.msra.mxu0 %v352
  %792 = vmatprep.subr.mxu0 %v361
  %793 = vmatpush1.msra.mxu0 %v360
  %794 = vmatprep.subr.mxu0 %v369
  %795 = vmatpush1.msra.mxu0 %v368
  %796 = vmatprep.subr.mxu0 %v377
  %797 = vmatpush1.msra.mxu0 %v376
  %798 = vmatprep.subr.mxu0 %v385
  %799 = vmatpush1.msra.mxu0 %v384
  %800 = vmatprep.subr.mxu0 %v393
  %801 = vmatpush1.msra.mxu0 %v392
  %802 = vmatprep.subr.mxu0 %v401
  %803 = vmatpush1.msra.mxu0 %v400
  %804 = vmatprep.subr.mxu0 %v409
  %805 = vmatpush1.msra.mxu0 %v408
  %806 = vmatprep.subr.mxu0 %v417
  %807 = vmatpush1.msra.mxu0 %v416
  %808 = vmatprep.subr.mxu0 %v425
  %809 = vmatpush1.msra.mxu0 %v424
  %810 = vmatprep.subr.mxu0 %v433
  %811 = vmatpush1.msra.mxu0 %v432
  %812 = vmatprep.subr.mxu0 %v441
  %813 = vmatpush1.msra.mxu0 %v440
  %814 = vmatprep.subr.mxu0 %v449
  %815 = vmatpush1.msra.mxu0 %v448
  %816 = vmatprep.subr.mxu0 %v457
  %817 = vmatpush1.msra.mxu0 %v456
  %818 = vmatprep.subr.mxu0 %v465
  %819 = vmatpush1.msra.mxu0 %v464
  %820 = vmatprep.subr.mxu0 %v473
  %821 = vmatpush1.msra.mxu0 %v472
  %822 = vmatprep.subr.mxu0 %v481
  %823 = vmatpush1.msra.mxu0 %v480
  %824 = vmatprep.subr.mxu0 %v489
  %825 = vmatpush1.msra.mxu0 %v488
  %826 = vmatprep.subr.mxu0 %v497
  %827 = vmatpush1.msra.mxu0 %v496
  %828 = vmatprep.subr.mxu0 %v505
  %829 = vmatpush1.msra.mxu0 %v504
  %830 = vmatprep.subr.mxu0 %v513
  %831 = vmatpush1.msra.mxu0 %v512
  %832 = vmatprep.subr.mxu0 %v545
  %833 = vmatpush1.msra.mxu0 %v542
  %834 = vmatprep.subr.mxu0 0.0
  %835 = vmatpush1.msra.mxu0 0.0
  %836 = vmatprep.mubr.f32.mxu0 %v532
  %837 = vmatmul.mubr.f32.gmra.mrb[0].mxu0 %v21
  %v838 = vpop.f32.mrb[0].mxu0
  %v839 = vadd.f32 %v768, %v838
  %v840 = vpop.f32.mrb[0].mxu0
  %v841 = vadd.f32 %v770, %v840
  %842 = vdwg.mxu0
  %843 = vmatprep.subr.mxu0 %v27
  %844 = vmatpush1.msra.mxu0 %v26
  %845 = vmatprep.subr.mxu0 %v35
  %846 = vmatpush1.msra.mxu0 %v34
  %847 = vmatprep.subr.mxu0 %v43
  %848 = vmatpush1.msra.mxu0 %v42
  %849 = vmatprep.subr.mxu0 %v51
  %850 = vmatpush1.msra.mxu0 %v50
  %851 = vmatprep.subr.mxu0 %v59
  %852 = vmatpush1.msra.mxu0 %v58
  %853 = vmatprep.subr.mxu0 %v67
  %854 = vmatpush1.msra.mxu0 %v66
  %855 = vmatprep.subr.mxu0 %v75
  %856 = vmatpush1.msra.mxu0 %v74
  %857 = vmatprep.subr.mxu0 %v83
  %858 = vmatpush1.msra.mxu0 %v82
  %859 = vmatprep.subr.mxu0 %v91
  %860 = vmatpush1.msra.mxu0 %v90
  %861 = vmatprep.subr.mxu0 %v99
  %862 = vmatpush1.msra.mxu0 %v98
  %863 = vmatprep.subr.mxu0 %v107
  %864 = vmatpush1.msra.mxu0 %v106
  %865 = vmatprep.subr.mxu0 %v115
  %866 = vmatpush1.msra.mxu0 %v114
  %867 = vmatprep.subr.mxu0 %v123
  %868 = vmatpush1.msra.mxu0 %v122
  %869 = vmatprep.subr.mxu0 %v131
  %870 = vmatpush1.msra.mxu0 %v130
  %871 = vmatprep.subr.mxu0 %v139
  %872 = vmatpush1.msra.mxu0 %v138
  %873 = vmatprep.subr.mxu0 %v147
  %874 = vmatpush1.msra.mxu0 %v146
  %875 = vmatprep.subr.mxu0 %v155
  %876 = vmatpush1.msra.mxu0 %v154
  %877 = vmatprep.subr.mxu0 %v163
  %878 = vmatpush1.msra.mxu0 %v162
  %879 = vmatprep.subr.mxu0 %v171
  %880 = vmatpush1.msra.mxu0 %v170
  %881 = vmatprep.subr.mxu0 %v179
  %882 = vmatpush1.msra.mxu0 %v178
  %883 = vmatprep.subr.mxu0 %v187
  %884 = vmatpush1.msra.mxu0 %v186
  %885 = vmatprep.subr.mxu0 %v195
  %886 = vmatpush1.msra.mxu0 %v194
  %887 = vmatprep.subr.mxu0 %v203
  %888 = vmatpush1.msra.mxu0 %v202
  %889 = vmatprep.subr.mxu0 %v211
  %890 = vmatpush1.msra.mxu0 %v210
  %891 = vmatprep.subr.mxu0 %v219
  %892 = vmatpush1.msra.mxu0 %v218
  %893 = vmatprep.subr.mxu0 %v227
  %894 = vmatpush1.msra.mxu0 %v226
  %895 = vmatprep.subr.mxu0 %v235
  %896 = vmatpush1.msra.mxu0 %v234
  %897 = vmatprep.subr.mxu0 %v243
  %898 = vmatpush1.msra.mxu0 %v242
  %899 = vmatprep.subr.mxu0 %v251
  %900 = vmatpush1.msra.mxu0 %v250
  %901 = vmatprep.subr.mxu0 %v259
  %902 = vmatpush1.msra.mxu0 %v258
  %903 = vmatprep.subr.mxu0 %v267
  %904 = vmatpush1.msra.mxu0 %v266
  %905 = vmatprep.subr.mxu0 %v275
  %906 = vmatpush1.msra.mxu0 %v274
  %907 = vmatprep.mubr.f32.mxu0 %v528
  %908 = vmatmul.mubr.f32.gmra.mrb[0].mxu0 %v20
  %v909 = vpop.f32.mrb[0].mxu0
  %v910 = vadd.f32 0.0, %v909
  %v911 = vpop.f32.mrb[0].mxu0
  %v912 = vadd.f32 0.0, %v911
  %913 = vdwg.mxu0
  %914 = vmatprep.subr.mxu0 %v283
  %915 = vmatpush1.msra.mxu0 %v282
  %916 = vmatprep.subr.mxu0 %v291
  %917 = vmatpush1.msra.mxu0 %v290
  %918 = vmatprep.subr.mxu0 %v299
  %919 = vmatpush1.msra.mxu0 %v298
  %920 = vmatprep.subr.mxu0 %v307
  %921 = vmatpush1.msra.mxu0 %v306
  %922 = vmatprep.subr.mxu0 %v315
  %923 = vmatpush1.msra.mxu0 %v314
  %924 = vmatprep.subr.mxu0 %v323
  %925 = vmatpush1.msra.mxu0 %v322
  %926 = vmatprep.subr.mxu0 %v331
  %927 = vmatpush1.msra.mxu0 %v330
  %928 = vmatprep.subr.mxu0 %v339
  %929 = vmatpush1.msra.mxu0 %v338
  %930 = vmatprep.subr.mxu0 %v347
  %931 = vmatpush1.msra.mxu0 %v346
  %932 = vmatprep.subr.mxu0 %v355
  %933 = vmatpush1.msra.mxu0 %v354
  %934 = vmatprep.subr.mxu0 %v363
  %935 = vmatpush1.msra.mxu0 %v362
  %936 = vmatprep.subr.mxu0 %v371
  %937 = vmatpush1.msra.mxu0 %v370
  %938 = vmatprep.subr.mxu0 %v379
  %939 = vmatpush1.msra.mxu0 %v378
  %940 = vmatprep.subr.mxu0 %v387
  %941 = vmatpush1.msra.mxu0 %v386
  %942 = vmatprep.subr.mxu0 %v395
  %943 = vmatpush1.msra.mxu0 %v394
  %944 = vmatprep.subr.mxu0 %v403
  %945 = vmatpush1.msra.mxu0 %v402
  %946 = vmatprep.subr.mxu0 %v411
  %947 = vmatpush1.msra.mxu0 %v410
  %948 = vmatprep.subr.mxu0 %v419
  %949 = vmatpush1.msra.mxu0 %v418
  %950 = vmatprep.subr.mxu0 %v427
  %951 = vmatpush1.msra.mxu0 %v426
  %952 = vmatprep.subr.mxu0 %v435
  %953 = vmatpush1.msra.mxu0 %v434
  %954 = vmatprep.subr.mxu0 %v443
  %955 = vmatpush1.msra.mxu0 %v442
  %956 = vmatprep.subr.mxu0 %v451
  %957 = vmatpush1.msra.mxu0 %v450
  %958 = vmatprep.subr.mxu0 %v459
  %959 = vmatpush1.msra.mxu0 %v458
  %960 = vmatprep.subr.mxu0 %v467
  %961 = vmatpush1.msra.mxu0 %v466
  %962 = vmatprep.subr.mxu0 %v475
  %963 = vmatpush1.msra.mxu0 %v474
  %964 = vmatprep.subr.mxu0 %v483
  %965 = vmatpush1.msra.mxu0 %v482
  %966 = vmatprep.subr.mxu0 %v491
  %967 = vmatpush1.msra.mxu0 %v490
  %968 = vmatprep.subr.mxu0 %v499
  %969 = vmatpush1.msra.mxu0 %v498
  %970 = vmatprep.subr.mxu0 %v507
  %971 = vmatpush1.msra.mxu0 %v506
  %972 = vmatprep.subr.mxu0 %v515
  %973 = vmatpush1.msra.mxu0 %v514
  %974 = vmatprep.subr.mxu0 %v551
  %975 = vmatpush1.msra.mxu0 %v548
  %976 = vmatprep.subr.mxu0 0.0
  %977 = vmatpush1.msra.mxu0 0.0
  %978 = vmatprep.mubr.f32.mxu0 %v532
  %979 = vmatmul.mubr.f32.gmra.mrb[0].mxu0 %v21
  %v980 = vpop.f32.mrb[0].mxu0
  %v981 = vadd.f32 %v910, %v980
  %v982 = vpop.f32.mrb[0].mxu0
  %v983 = vadd.f32 %v912, %v982
  %984 = vdwg.mxu0
  %985 = vmatprep.subr.mxu0 %v29
  %986 = vmatpush1.msra.mxu0 %v28
  %987 = vmatprep.subr.mxu0 %v37
  %988 = vmatpush1.msra.mxu0 %v36
  %989 = vmatprep.subr.mxu0 %v45
  %990 = vmatpush1.msra.mxu0 %v44
  %991 = vmatprep.subr.mxu0 %v53
  %992 = vmatpush1.msra.mxu0 %v52
  %993 = vmatprep.subr.mxu0 %v61
  %994 = vmatpush1.msra.mxu0 %v60
  %995 = vmatprep.subr.mxu0 %v69
  %996 = vmatpush1.msra.mxu0 %v68
  %997 = vmatprep.subr.mxu0 %v77
  %998 = vmatpush1.msra.mxu0 %v76
  %999 = vmatprep.subr.mxu0 %v85
  %1000 = vmatpush1.msra.mxu0 %v84
  %1001 = vmatprep.subr.mxu0 %v93
  %1002 = vmatpush1.msra.mxu0 %v92
  %1003 = vmatprep.subr.mxu0 %v101
  %1004 = vmatpush1.msra.mxu0 %v100
  %1005 = vmatprep.subr.mxu0 %v109
  %1006 = vmatpush1.msra.mxu0 %v108
  %1007 = vmatprep.subr.mxu0 %v117
  %1008 = vmatpush1.msra.mxu0 %v116
  %1009 = vmatprep.subr.mxu0 %v125
  %1010 = vmatpush1.msra.mxu0 %v124
  %1011 = vmatprep.subr.mxu0 %v133
  %1012 = vmatpush1.msra.mxu0 %v132
  %1013 = vmatprep.subr.mxu0 %v141
  %1014 = vmatpush1.msra.mxu0 %v140
  %1015 = vmatprep.subr.mxu0 %v149
  %1016 = vmatpush1.msra.mxu0 %v148
  %1017 = vmatprep.subr.mxu0 %v157
  %1018 = vmatpush1.msra.mxu0 %v156
  %1019 = vmatprep.subr.mxu0 %v165
  %1020 = vmatpush1.msra.mxu0 %v164
  %1021 = vmatprep.subr.mxu0 %v173
  %1022 = vmatpush1.msra.mxu0 %v172
  %1023 = vmatprep.subr.mxu0 %v181
  %1024 = vmatpush1.msra.mxu0 %v180
  %1025 = vmatprep.subr.mxu0 %v189
  %1026 = vmatpush1.msra.mxu0 %v188
  %1027 = vmatprep.subr.mxu0 %v197
  %1028 = vmatpush1.msra.mxu0 %v196
  %1029 = vmatprep.subr.mxu0 %v205
  %1030 = vmatpush1.msra.mxu0 %v204
  %1031 = vmatprep.subr.mxu0 %v213
  %1032 = vmatpush1.msra.mxu0 %v212
  %1033 = vmatprep.subr.mxu0 %v221
  %1034 = vmatpush1.msra.mxu0 %v220
  %1035 = vmatprep.subr.mxu0 %v229
  %1036 = vmatpush1.msra.mxu0 %v228
  %1037 = vmatprep.subr.mxu0 %v237
  %1038 = vmatpush1.msra.mxu0 %v236
  %1039 = vmatprep.subr.mxu0 %v245
  %1040 = vmatpush1.msra.mxu0 %v244
  %1041 = vmatprep.subr.mxu0 %v253
  %1042 = vmatpush1.msra.mxu0 %v252
  %1043 = vmatprep.subr.mxu0 %v261
  %1044 = vmatpush1.msra.mxu0 %v260
  %1045 = vmatprep.subr.mxu0 %v269
  %1046 = vmatpush1.msra.mxu0 %v268
  %1047 = vmatprep.subr.mxu0 %v277
  %1048 = vmatpush1.msra.mxu0 %v276
  %1049 = vmatprep.mubr.f32.mxu0 %v528
  %1050 = vmatmul.mubr.f32.gmra.mrb[0].mxu0 %v20
  %v1051 = vpop.f32.mrb[0].mxu0
  %v1052 = vadd.f32 0.0, %v1051
  %v1053 = vpop.f32.mrb[0].mxu0
  %v1054 = vadd.f32 0.0, %v1053
  %1055 = vdwg.mxu0
  %1056 = vmatprep.subr.mxu0 %v285
  %1057 = vmatpush1.msra.mxu0 %v284
  %1058 = vmatprep.subr.mxu0 %v293
  %1059 = vmatpush1.msra.mxu0 %v292
  %1060 = vmatprep.subr.mxu0 %v301
  %1061 = vmatpush1.msra.mxu0 %v300
  %1062 = vmatprep.subr.mxu0 %v309
  %1063 = vmatpush1.msra.mxu0 %v308
  %1064 = vmatprep.subr.mxu0 %v317
  %1065 = vmatpush1.msra.mxu0 %v316
  %1066 = vmatprep.subr.mxu0 %v325
  %1067 = vmatpush1.msra.mxu0 %v324
  %1068 = vmatprep.subr.mxu0 %v333
  %1069 = vmatpush1.msra.mxu0 %v332
  %1070 = vmatprep.subr.mxu0 %v341
  %1071 = vmatpush1.msra.mxu0 %v340
  %1072 = vmatprep.subr.mxu0 %v349
  %1073 = vmatpush1.msra.mxu0 %v348
  %1074 = vmatprep.subr.mxu0 %v357
  %1075 = vmatpush1.msra.mxu0 %v356
  %1076 = vmatprep.subr.mxu0 %v365
  %1077 = vmatpush1.msra.mxu0 %v364
  %1078 = vmatprep.subr.mxu0 %v373
  %1079 = vmatpush1.msra.mxu0 %v372
  %1080 = vmatprep.subr.mxu0 %v381
  %1081 = vmatpush1.msra.mxu0 %v380
  %1082 = vmatprep.subr.mxu0 %v389
  %1083 = vmatpush1.msra.mxu0 %v388
  %1084 = vmatprep.subr.mxu0 %v397
  %1085 = vmatpush1.msra.mxu0 %v396
  %1086 = vmatprep.subr.mxu0 %v405
  %1087 = vmatpush1.msra.mxu0 %v404
  %1088 = vmatprep.subr.mxu0 %v413
  %1089 = vmatpush1.msra.mxu0 %v412
  %1090 = vmatprep.subr.mxu0 %v421
  %1091 = vmatpush1.msra.mxu0 %v420
  %1092 = vmatprep.subr.mxu0 %v429
  %1093 = vmatpush1.msra.mxu0 %v428
  %1094 = vmatprep.subr.mxu0 %v437
  %1095 = vmatpush1.msra.mxu0 %v436
  %1096 = vmatprep.subr.mxu0 %v445
  %1097 = vmatpush1.msra.mxu0 %v444
  %1098 = vmatprep.subr.mxu0 %v453
  %1099 = vmatpush1.msra.mxu0 %v452
  %1100 = vmatprep.subr.mxu0 %v461
  %1101 = vmatpush1.msra.mxu0 %v460
  %1102 = vmatprep.subr.mxu0 %v469
  %1103 = vmatpush1.msra.mxu0 %v468
  %1104 = vmatprep.subr.mxu0 %v477
  %1105 = vmatpush1.msra.mxu0 %v476
  %1106 = vmatprep.subr.mxu0 %v485
  %1107 = vmatpush1.msra.mxu0 %v484
  %1108 = vmatprep.subr.mxu0 %v493
  %1109 = vmatpush1.msra.mxu0 %v492
  %1110 = vmatprep.subr.mxu0 %v501
  %1111 = vmatpush1.msra.mxu0 %v500
  %1112 = vmatprep.subr.mxu0 %v509
  %1113 = vmatpush1.msra.mxu0 %v508
  %1114 = vmatprep.subr.mxu0 %v517
  %1115 = vmatpush1.msra.mxu0 %v516
  %1116 = vmatprep.subr.mxu0 %v557
  %1117 = vmatpush1.msra.mxu0 %v554
  %1118 = vmatprep.subr.mxu0 0.0
  %1119 = vmatpush1.msra.mxu0 0.0
  %1120 = vmatprep.mubr.f32.mxu0 %v532
  %1121 = vmatmul.mubr.f32.gmra.mrb[0].mxu0 %v21
  %v1122 = vpop.f32.mrb[0].mxu0
  %v1123 = vadd.f32 %v1052, %v1122
  %v1124 = vpop.f32.mrb[0].mxu0
  %v1125 = vadd.f32 %v1054, %v1124
  %1126 = vdwg.mxu0
  %vm1127 = vcmp.gt.f32.partialorder %v697, 0.0
  %vm1128 = vcmp.gt.f32.partialorder %v699, 0.0
  %vm1129 = vcmp.gt.f32.partialorder %v839, 0.0
  %vm1130 = vcmp.gt.f32.partialorder %v841, 0.0
  %vm1131 = vcmp.gt.f32.partialorder %v981, 0.0
  %vm1132 = vcmp.gt.f32.partialorder %v983, 0.0
  %vm1133 = vcmp.gt.f32.partialorder %v1123, 0.0
  %vm1134 = vcmp.gt.f32.partialorder %v1125, 0.0
  %v1135 = vld [vmem:[%s2] sm:$0xf]
  %1137 = vset.pattern.permute.xlu0 0
  %1138 = vperm.xlu0 %1137, %v1135
  %v1139 = vpop.permute.xlu0 %1138
  %v1141 = vmul.f32 %v697, %v1139
  %v1142 = vmul.f32 %v699, %v1139
  %v1143 = vmul.f32 %v839, %v1139
  %v1144 = vmul.f32 %v841, %v1139
  %v1145 = vmul.f32 %v981, %v1139
  %v1146 = vmul.f32 %v983, %v1139
  %v1147 = vmul.f32 %v1123, %v1139
  %v1148 = vmul.f32 %v1125, %v1139
  %v1149 = vsel %vm1127, %v697, %v1141
  %v1150 = vsel %vm1128, %v699, %v1142
  %v1151 = vsel %vm1129, %v839, %v1143
  %v1152 = vsel %vm1130, %v841, %v1144
  %v1153 = vsel %vm1131, %v981, %v1145
  %v1154 = vsel %vm1132, %v983, %v1146
  %v1155 = vsel %vm1133, %v1123, %v1147
  %v1156 = vsel %vm1134, %v1125, %v1148
  %v1157 = vld [vmem:[%s3] sm:$0xff]
  %vm1158 = vcmask 31744
  %v1160 = vsel %vm1158, %v1157, 0
  %v1163 = vsel %vm534, %v1149, 0
  %v1166 = vsel %vm534, %v1150, 0
  %v1169 = vsel %vm534, %v1151, 0
  %v1172 = vsel %vm534, %v1152, 0
  %v1175 = vsel %vm534, %v1153, 0
  %v1178 = vsel %vm534, %v1154, 0
  %v1181 = vsel %vm534, %v1155, 0
  %v1184 = vsel %vm534, %v1156, 0
  %1186 = vmatprep.subr.mxu0 %v1166
  %1187 = vmatpush1.msra.mxu0 %v1163
  %1188 = vmatprep.subr.mxu0 0.0
  %1189 = vmatpush1.msra.mxu0 0.0
  %1190 = vmatprep.subr.mxu0 0.0
  %1191 = vmatpush1.msra.mxu0 0.0
  %1192 = vmatprep.subr.mxu0 0.0
  %1193 = vmatpush1.msra.mxu0 0.0
  %1194 = vmatprep.subr.mxu0 0.0
  %1195 = vmatpush1.msra.mxu0 0.0
  %1196 = vmatprep.subr.mxu0 0.0
  %1197 = vmatpush1.msra.mxu0 0.0
  %1198 = vmatprep.subr.mxu0 0.0
  %1199 = vmatpush1.msra.mxu0 0.0
  %1200 = vmatprep.subr.mxu0 0.0
  %1201 = vmatpush1.msra.mxu0 0.0
  %1202 = vmatprep.subr.mxu0 0.0
  %1203 = vmatpush1.msra.mxu0 0.0
  %1204 = vmatprep.subr.mxu0 0.0
  %1205 = vmatpush1.msra.mxu0 0.0
  %1206 = vmatprep.subr.mxu0 0.0
  %1207 = vmatpush1.msra.mxu0 0.0
  %1208 = vmatprep.subr.mxu0 0.0
  %1209 = vmatpush1.msra.mxu0 0.0
  %1210 = vmatprep.subr.mxu0 0.0
  %1211 = vmatpush1.msra.mxu0 0.0
  %1212 = vmatprep.subr.mxu0 0.0
  %1213 = vmatpush1.msra.mxu0 0.0
  %1214 = vmatprep.subr.mxu0 0.0
  %1215 = vmatpush1.msra.mxu0 0.0
  %1216 = vmatprep.subr.mxu0 0.0
  %1217 = vmatpush1.msra.mxu0 0.0
  %1218 = vmatprep.subr.mxu0 0.0
  %1219 = vmatpush1.msra.mxu0 0.0
  %1220 = vmatprep.subr.mxu0 0.0
  %1221 = vmatpush1.msra.mxu0 0.0
  %1222 = vmatprep.subr.mxu0 0.0
  %1223 = vmatpush1.msra.mxu0 0.0
  %1224 = vmatprep.subr.mxu0 0.0
  %1225 = vmatpush1.msra.mxu0 0.0
  %1226 = vmatprep.subr.mxu0 0.0
  %1227 = vmatpush1.msra.mxu0 0.0
  %1228 = vmatprep.subr.mxu0 0.0
  %1229 = vmatpush1.msra.mxu0 0.0
  %1230 = vmatprep.subr.mxu0 0.0
  %1231 = vmatpush1.msra.mxu0 0.0
  %1232 = vmatprep.subr.mxu0 0.0
  %1233 = vmatpush1.msra.mxu0 0.0
  %1234 = vmatprep.subr.mxu0 0.0
  %1235 = vmatpush1.msra.mxu0 0.0
  %1236 = vmatprep.subr.mxu0 0.0
  %1237 = vmatpush1.msra.mxu0 0.0
  %1238 = vmatprep.subr.mxu0 0.0
  %1239 = vmatpush1.msra.mxu0 0.0
  %1240 = vmatprep.subr.mxu0 0.0
  %1241 = vmatpush1.msra.mxu0 0.0
  %1242 = vmatprep.subr.mxu0 0.0
  %1243 = vmatpush1.msra.mxu0 0.0
  %1244 = vmatprep.subr.mxu0 0.0
  %1245 = vmatpush1.msra.mxu0 0.0
  %1246 = vmatprep.subr.mxu0 0.0
  %1247 = vmatpush1.msra.mxu0 0.0
  %1248 = vmatprep.subr.mxu0 0.0
  %1249 = vmatpush1.msra.mxu0 0.0
  %1250 = vmatprep.mubr.f32.mxu0 0.0
  %1251 = vmatmul.mubr.f32.gmra.mrb[0].mxu0 %v1160
  %v1252 = vpop.f32.mrb[0].mxu0
  %v1253 = vadd.f32 0.0, %v1252
  %v1254 = vpop.f32.mrb[0].mxu0
  %v1255 = vadd.f32 0.0, %v1254
  %1256 = vdwg.mxu0
  %1257 = vmatprep.subr.mxu0 %v1172
  %1258 = vmatpush1.msra.mxu0 %v1169
  %1259 = vmatprep.subr.mxu0 0.0
  %1260 = vmatpush1.msra.mxu0 0.0
  %1261 = vmatprep.subr.mxu0 0.0
  %1262 = vmatpush1.msra.mxu0 0.0
  %1263 = vmatprep.subr.mxu0 0.0
  %1264 = vmatpush1.msra.mxu0 0.0
  %1265 = vmatprep.subr.mxu0 0.0
  %1266 = vmatpush1.msra.mxu0 0.0
  %1267 = vmatprep.subr.mxu0 0.0
  %1268 = vmatpush1.msra.mxu0 0.0
  %1269 = vmatprep.subr.mxu0 0.0
  %1270 = vmatpush1.msra.mxu0 0.0
  %1271 = vmatprep.subr.mxu0 0.0
  %1272 = vmatpush1.msra.mxu0 0.0
  %1273 = vmatprep.subr.mxu0 0.0
  %1274 = vmatpush1.msra.mxu0 0.0
  %1275 = vmatprep.subr.mxu0 0.0
  %1276 = vmatpush1.msra.mxu0 0.0
  %1277 = vmatprep.subr.mxu0 0.0
  %1278 = vmatpush1.msra.mxu0 0.0
  %1279 = vmatprep.subr.mxu0 0.0
  %1280 = vmatpush1.msra.mxu0 0.0
  %1281 = vmatprep.subr.mxu0 0.0
  %1282 = vmatpush1.msra.mxu0 0.0
  %1283 = vmatprep.subr.mxu0 0.0
  %1284 = vmatpush1.msra.mxu0 0.0
  %1285 = vmatprep.subr.mxu0 0.0
  %1286 = vmatpush1.msra.mxu0 0.0
  %1287 = vmatprep.subr.mxu0 0.0
  %1288 = vmatpush1.msra.mxu0 0.0
  %1289 = vmatprep.subr.mxu0 0.0
  %1290 = vmatpush1.msra.mxu0 0.0
  %1291 = vmatprep.subr.mxu0 0.0
  %1292 = vmatpush1.msra.mxu0 0.0
  %1293 = vmatprep.subr.mxu0 0.0
  %1294 = vmatpush1.msra.mxu0 0.0
  %1295 = vmatprep.subr.mxu0 0.0
  %1296 = vmatpush1.msra.mxu0 0.0
  %1297 = vmatprep.subr.mxu0 0.0
  %1298 = vmatpush1.msra.mxu0 0.0
  %1299 = vmatprep.subr.mxu0 0.0
  %1300 = vmatpush1.msra.mxu0 0.0
  %1301 = vmatprep.subr.mxu0 0.0
  %1302 = vmatpush1.msra.mxu0 0.0
  %1303 = vmatprep.subr.mxu0 0.0
  %1304 = vmatpush1.msra.mxu0 0.0
  %1305 = vmatprep.subr.mxu0 0.0
  %1306 = vmatpush1.msra.mxu0 0.0
  %1307 = vmatprep.subr.mxu0 0.0
  %1308 = vmatpush1.msra.mxu0 0.0
  %1309 = vmatprep.subr.mxu0 0.0
  %1310 = vmatpush1.msra.mxu0 0.0
  %1311 = vmatprep.subr.mxu0 0.0
  %1312 = vmatpush1.msra.mxu0 0.0
  %1313 = vmatprep.subr.mxu0 0.0
  %1314 = vmatpush1.msra.mxu0 0.0
  %1315 = vmatprep.subr.mxu0 0.0
  %1316 = vmatpush1.msra.mxu0 0.0
  %1317 = vmatprep.subr.mxu0 0.0
  %1318 = vmatpush1.msra.mxu0 0.0
  %1319 = vmatprep.subr.mxu0 0.0
  %1320 = vmatpush1.msra.mxu0 0.0
  %1321 = vmatprep.mubr.f32.mxu0 0.0
  %1322 = vmatmul.mubr.f32.gmra.mrb[0].mxu0 %v1160
  %v1323 = vpop.f32.mrb[0].mxu0
  %v1324 = vadd.f32 0.0, %v1323
  %v1325 = vpop.f32.mrb[0].mxu0
  %v1326 = vadd.f32 0.0, %v1325
  %1327 = vdwg.mxu0
  %1328 = vmatprep.subr.mxu0 %v1178
  %1329 = vmatpush1.msra.mxu0 %v1175
  %1330 = vmatprep.subr.mxu0 0.0
  %1331 = vmatpush1.msra.mxu0 0.0
  %1332 = vmatprep.subr.mxu0 0.0
  %1333 = vmatpush1.msra.mxu0 0.0
  %1334 = vmatprep.subr.mxu0 0.0
  %1335 = vmatpush1.msra.mxu0 0.0
  %1336 = vmatprep.subr.mxu0 0.0
  %1337 = vmatpush1.msra.mxu0 0.0
  %1338 = vmatprep.subr.mxu0 0.0
  %1339 = vmatpush1.msra.mxu0 0.0
  %1340 = vmatprep.subr.mxu0 0.0
  %1341 = vmatpush1.msra.mxu0 0.0
  %1342 = vmatprep.subr.mxu0 0.0
  %1343 = vmatpush1.msra.mxu0 0.0
  %1344 = vmatprep.subr.mxu0 0.0
  %1345 = vmatpush1.msra.mxu0 0.0
  %1346 = vmatprep.subr.mxu0 0.0
  %1347 = vmatpush1.msra.mxu0 0.0
  %1348 = vmatprep.subr.mxu0 0.0
  %1349 = vmatpush1.msra.mxu0 0.0
  %1350 = vmatprep.subr.mxu0 0.0
  %1351 = vmatpush1.msra.mxu0 0.0
  %1352 = vmatprep.subr.mxu0 0.0
  %1353 = vmatpush1.msra.mxu0 0.0
  %1354 = vmatprep.subr.mxu0 0.0
  %1355 = vmatpush1.msra.mxu0 0.0
  %1356 = vmatprep.subr.mxu0 0.0
  %1357 = vmatpush1.msra.mxu0 0.0
  %1358 = vmatprep.subr.mxu0 0.0
  %1359 = vmatpush1.msra.mxu0 0.0
  %1360 = vmatprep.subr.mxu0 0.0
  %1361 = vmatpush1.msra.mxu0 0.0
  %1362 = vmatprep.subr.mxu0 0.0
  %1363 = vmatpush1.msra.mxu0 0.0
  %1364 = vmatprep.subr.mxu0 0.0
  %1365 = vmatpush1.msra.mxu0 0.0
  %1366 = vmatprep.subr.mxu0 0.0
  %1367 = vmatpush1.msra.mxu0 0.0
  %1368 = vmatprep.subr.mxu0 0.0
  %1369 = vmatpush1.msra.mxu0 0.0
  %1370 = vmatprep.subr.mxu0 0.0
  %1371 = vmatpush1.msra.mxu0 0.0
  %1372 = vmatprep.subr.mxu0 0.0
  %1373 = vmatpush1.msra.mxu0 0.0
  %1374 = vmatprep.subr.mxu0 0.0
  %1375 = vmatpush1.msra.mxu0 0.0
  %1376 = vmatprep.subr.mxu0 0.0
  %1377 = vmatpush1.msra.mxu0 0.0
  %1378 = vmatprep.subr.mxu0 0.0
  %1379 = vmatpush1.msra.mxu0 0.0
  %1380 = vmatprep.subr.mxu0 0.0
  %1381 = vmatpush1.msra.mxu0 0.0
  %1382 = vmatprep.subr.mxu0 0.0
  %1383 = vmatpush1.msra.mxu0 0.0
  %1384 = vmatprep.subr.mxu0 0.0
  %1385 = vmatpush1.msra.mxu0 0.0
  %1386 = vmatprep.subr.mxu0 0.0
  %1387 = vmatpush1.msra.mxu0 0.0
  %1388 = vmatprep.subr.mxu0 0.0
  %1389 = vmatpush1.msra.mxu0 0.0
  %1390 = vmatprep.subr.mxu0 0.0
  %1391 = vmatpush1.msra.mxu0 0.0
  %1392 = vmatprep.mubr.f32.mxu0 0.0
  %1393 = vmatmul.mubr.f32.gmra.mrb[0].mxu0 %v1160
  %v1394 = vpop.f32.mrb[0].mxu0
  %v1395 = vadd.f32 0.0, %v1394
  %v1396 = vpop.f32.mrb[0].mxu0
  %v1397 = vadd.f32 0.0, %v1396
  %1398 = vdwg.mxu0
  %1399 = vmatprep.subr.mxu0 %v1184
  %1400 = vmatpush1.msra.mxu0 %v1181
  %1401 = vmatprep.subr.mxu0 0.0
  %1402 = vmatpush1.msra.mxu0 0.0
  %1403 = vmatprep.subr.mxu0 0.0
  %1404 = vmatpush1.msra.mxu0 0.0
  %1405 = vmatprep.subr.mxu0 0.0
  %1406 = vmatpush1.msra.mxu0 0.0
  %1407 = vmatprep.subr.mxu0 0.0
  %1408 = vmatpush1.msra.mxu0 0.0
  %1409 = vmatprep.subr.mxu0 0.0
  %1410 = vmatpush1.msra.mxu0 0.0
  %1411 = vmatprep.subr.mxu0 0.0
  %1412 = vmatpush1.msra.mxu0 0.0
  %1413 = vmatprep.subr.mxu0 0.0
  %1414 = vmatpush1.msra.mxu0 0.0
  %1415 = vmatprep.subr.mxu0 0.0
  %1416 = vmatpush1.msra.mxu0 0.0
  %1417 = vmatprep.subr.mxu0 0.0
  %1418 = vmatpush1.msra.mxu0 0.0
  %1419 = vmatprep.subr.mxu0 0.0
  %1420 = vmatpush1.msra.mxu0 0.0
  %1421 = vmatprep.subr.mxu0 0.0
  %1422 = vmatpush1.msra.mxu0 0.0
  %1423 = vmatprep.subr.mxu0 0.0
  %1424 = vmatpush1.msra.mxu0 0.0
  %1425 = vmatprep.subr.mxu0 0.0
  %1426 = vmatpush1.msra.mxu0 0.0
  %1427 = vmatprep.subr.mxu0 0.0
  %1428 = vmatpush1.msra.mxu0 0.0
  %1429 = vmatprep.subr.mxu0 0.0
  %1430 = vmatpush1.msra.mxu0 0.0
  %1431 = vmatprep.subr.mxu0 0.0
  %1432 = vmatpush1.msra.mxu0 0.0
  %1433 = vmatprep.subr.mxu0 0.0
  %1434 = vmatpush1.msra.mxu0 0.0
  %1435 = vmatprep.subr.mxu0 0.0
  %1436 = vmatpush1.msra.mxu0 0.0
  %1437 = vmatprep.subr.mxu0 0.0
  %1438 = vmatpush1.msra.mxu0 0.0
  %1439 = vmatprep.subr.mxu0 0.0
  %1440 = vmatpush1.msra.mxu0 0.0
  %1441 = vmatprep.subr.mxu0 0.0
  %1442 = vmatpush1.msra.mxu0 0.0
  %1443 = vmatprep.subr.mxu0 0.0
  %1444 = vmatpush1.msra.mxu0 0.0
  %1445 = vmatprep.subr.mxu0 0.0
  %1446 = vmatpush1.msra.mxu0 0.0
  %1447 = vmatprep.subr.mxu0 0.0
  %1448 = vmatpush1.msra.mxu0 0.0
  %1449 = vmatprep.subr.mxu0 0.0
  %1450 = vmatpush1.msra.mxu0 0.0
  %1451 = vmatprep.subr.mxu0 0.0
  %1452 = vmatpush1.msra.mxu0 0.0
  %1453 = vmatprep.subr.mxu0 0.0
  %1454 = vmatpush1.msra.mxu0 0.0
  %1455 = vmatprep.subr.mxu0 0.0
  %1456 = vmatpush1.msra.mxu0 0.0
  %1457 = vmatprep.subr.mxu0 0.0
  %1458 = vmatpush1.msra.mxu0 0.0
  %1459 = vmatprep.subr.mxu0 0.0
  %1460 = vmatpush1.msra.mxu0 0.0
  %1461 = vmatprep.subr.mxu0 0.0
  %1462 = vmatpush1.msra.mxu0 0.0
  %1463 = vmatprep.mubr.f32.mxu0 0.0
  %1464 = vmatmul.mubr.f32.gmra.mrb[0].mxu0 %v1160
  %v1465 = vpop.f32.mrb[0].mxu0
  %v1466 = vadd.f32 0.0, %v1465
  %v1467 = vpop.f32.mrb[0].mxu0
  %v1468 = vadd.f32 0.0, %v1467
  %1469 = vdwg.mxu0
  %1470 = vst [vmem:[%s4] sm:$0xff] %v1253
  %1471 = vst [vmem:[%s4 + $0x8] sm:$0xff] %v1255
  %1472 = vst [vmem:[%s4 + $0x10] sm:$0xff] %v1324
  %1473 = vst [vmem:[%s4 + $0x18] sm:$0xff] %v1326
  %1474 = vst [vmem:[%s4 + $0x20] sm:$0xff] %v1395
  %1475 = vst [vmem:[%s4 + $0x28] sm:$0xff] %v1397
  %1476 = vst [vmem:[%s4 + $0x30] sm:$0xff] %v1466
  %1477 = vst [vmem:[%s4 + $0x38] sm:$0xff] %v1468
  %v1478 = vadd.f32 %v1253, %v1255
  %v1479 = vadd.f32 %v1478, %v1324
  %v1480 = vadd.f32 %v1479, %v1326
  %v1481 = vadd.f32 %v1480, %v1395
  %v1482 = vadd.f32 %v1481, %v1397
  %v1483 = vadd.f32 %v1482, %v1466
  %v1484 = vadd.f32 %v1483, %v1468
  %1485 = vadd.xlane.f32.xlu0 %v1484
  %v1486 = vpop.xlane.xlu0 %1485
  %vm1487 = vcmask 7168
  %1488 = vst.msk [vmem:[%s5] sm:$0xff] %vm1487, %v1486
  %v1489 = vmul.f32 %v1253, %v1253
  %v1490 = vmul.f32 %v1255, %v1255
  %v1491 = vmul.f32 %v1324, %v1324
  %v1492 = vmul.f32 %v1326, %v1326
  %v1493 = vmul.f32 %v1395, %v1395
  %v1494 = vmul.f32 %v1397, %v1397
  %v1495 = vmul.f32 %v1466, %v1466
  %v1496 = vmul.f32 %v1468, %v1468
  %v1497 = vadd.f32 %v1489, %v1490
  %v1498 = vadd.f32 %v1497, %v1491
  %v1499 = vadd.f32 %v1498, %v1492
  %v1500 = vadd.f32 %v1499, %v1493
  %v1501 = vadd.f32 %v1500, %v1494
  %v1502 = vadd.f32 %v1501, %v1495
  %v1503 = vadd.f32 %v1502, %v1496
  %1504 = vadd.xlane.f32.xlu0 %v1503
  %v1505 = vpop.xlane.xlu0 %1504
  %1506 = vst.msk [vmem:[%s6] sm:$0xff] %vm1487, %v1505
  // Predicated region
  $region18: #{residual_layer_forward.4} parent=0 // pred_check
    _
  $region19: #{residual_layer_forward.4} parent=0 // pred_check_branch
    %1508 = sbr.rel (0) target = $region21
  $region20: #{residual_layer_forward.4} parent=0 // pred_region
    _
  $region21: #{residual_layer_forward.4} parent=0 // pred_fallthru
    _
  // Predicated region
  $region22: #{residual_layer_forward.4} parent=0 // pred_check
    _
  $region23: #{residual_layer_forward.4} parent=0 // pred_check_branch
    %1510 = sbr.rel (0) target = $region25
  $region24: #{residual_layer_forward.4} parent=0 // pred_region
    _
  $region25: #{residual_layer_forward.4} parent=0 // pred_fallthru
    _
  // Predicated region
  $region26: #{residual_layer_forward.4} parent=0 // pred_check
    _
  $region27: #{residual_layer_forward.4} parent=0 // pred_check_branch
    %1512 = sbr.rel (0) target = $region29
  $region28: #{residual_layer_forward.4} parent=0 // pred_region
    _
  $region29: #{residual_layer_forward.4} parent=0 // pred_fallthru
    _
  // Predicated region
  $region30: #{residual_layer_forward.4} parent=0 // pred_check
    _
  $region31: #{residual_layer_forward.4} parent=0 // pred_check_branch
    %1514 = sbr.rel (0) target = $region33
  $region32: #{residual_layer_forward.4} parent=0 // pred_region
    _
  $region33: #{residual_layer_forward.4} parent=0 // pred_fallthru
    _
  // Predicated region
  $region34: #{residual_layer_forward.4} parent=0 // pred_check
    _
  $region35: #{residual_layer_forward.4} parent=0 // pred_check_branch
    %1516 = sbr.rel (0) target = $region37
  $region36: #{residual_layer_forward.4} parent=0 // pred_region
    _
  $region37: #{residual_layer_forward.4} parent=0 // pred_fallthru
    _
  // Predicated region
  $region38: #{residual_layer_forward.4} parent=0 // pred_check
    _
  $region39: #{residual_layer_forward.4} parent=0 // pred_check_branch
    %1518 = sbr.rel (0) target = $region41
  $region40: #{residual_layer_forward.4} parent=0 // pred_region
    _
  $region41: #{residual_layer_forward.4} parent=0 // pred_fallthru
    _

// kernel: residual_layer_forward.5
$region0: #{residual_layer_forward.5}
  #allocation0 [shape = 'u32[]', space=smem, size = 0x4, offset = 0x4, fixed_abs, tag = 'smem constant byte address 0x4 - core index']
  #allocation1 [shape = 'u32[144,128]{1,0:T(1,128)}', space=vmem, size = 0x12000, scoped, tag = 'internal scratch']
  %s0 = inlined_call_operand.vmem [shape: f32[8,1024], index: 0, kind: input, shape index: {}]
  %s1 = inlined_call_operand.vmem [shape: f32[8,1024], index: 1, kind: input, shape index: {}]
  %s2 = inlined_call_operand.vmem [shape: f32[8,1], index: 2, kind: input, shape index: {}]
  %s3 = inlined_call_operand.vmem [shape: f32[8,1], index: 3, kind: input, shape index: {}]
  %s4 = inlined_call_operand.vmem [shape: f32[8,1], index: 4, kind: input, shape index: {}]
  %s5 = inlined_call_operand.vmem [shape: f32[8,1024], index: 5, kind: output, shape index: {}]
  %s6 = sld [smem:[#allocation0]]
  $region30: #{residual_layer_forward.5} parent=0
    _
  %s8 = ssub.s32 1, %s6
  %s9 = scalar_select 0, %s8, %s6
  // Predicated region
  $region2: #{residual_layer_forward.5} parent=0 // pred_check
    _
  $region3: #{residual_layer_forward.5} parent=0 // pred_check_branch
    %11 = sbr.rel (0) target = $region5
  $region4: #{residual_layer_forward.5} parent=0 // pred_region
    _
  $region5: #{residual_layer_forward.5} parent=0 // pred_fallthru
    _
  // Predicated region
  $region6: #{residual_layer_forward.5} parent=0 // pred_check
    _
  $region7: #{residual_layer_forward.5} parent=0 // pred_check_branch
    %13 = sbr.rel (0) target = $region9
  $region8: #{residual_layer_forward.5} parent=0 // pred_region
    _
  $region9: #{residual_layer_forward.5} parent=0 // pred_fallthru
    _
  // Predicated region
  $region10: #{residual_layer_forward.5} parent=0 // pred_check
    _
  $region11: #{residual_layer_forward.5} parent=0 // pred_check_branch
    %15 = sbr.rel (0) target = $region13
  $region12: #{residual_layer_forward.5} parent=0 // pred_region
    _
  $region13: #{residual_layer_forward.5} parent=0 // pred_fallthru
    _
  // Predicated region
  $region14: #{residual_layer_forward.5} parent=0 // pred_check
    _
  $region15: #{residual_layer_forward.5} parent=0 // pred_check_branch
    %17 = sbr.rel (0) target = $region17
  $region16: #{residual_layer_forward.5} parent=0 // pred_region
    _
  $region17: #{residual_layer_forward.5} parent=0 // pred_fallthru
    _
  // Predicated region
  $region18: #{residual_layer_forward.5} parent=0 // pred_check
    _
  $region19: #{residual_layer_forward.5} parent=0 // pred_check_branch
    %19 = sbr.rel (0) target = $region21
  $region20: #{residual_layer_forward.5} parent=0 // pred_region
    _
  $region21: #{residual_layer_forward.5} parent=0 // pred_fallthru
    _
  %v20 = vld [vmem:[%s0] sm:$0xff]
  %v21 = vld [vmem:[%s0 + $0x8] sm:$0xff]
  %v22 = vld [vmem:[%s0 + $0x10] sm:$0xff]
  %v23 = vld [vmem:[%s0 + $0x18] sm:$0xff]
  %v24 = vld [vmem:[%s0 + $0x20] sm:$0xff]
  %v25 = vld [vmem:[%s0 + $0x28] sm:$0xff]
  %v26 = vld [vmem:[%s0 + $0x30] sm:$0xff]
  %v27 = vld [vmem:[%s0 + $0x38] sm:$0xff]
  %v28 = vld [vmem:[%s2] sm:$0xff]
  %30 = vset.pattern.permute.xlu0 0
  %31 = vperm.xlu0 %30, %v28
  %v32 = vpop.permute.xlu0 %31
  %v34 = vmul.f32 %v20, %v32
  %v35 = vmul.f32 %v21, %v32
  %v36 = vmul.f32 %v22, %v32
  %v37 = vmul.f32 %v23, %v32
  %v38 = vmul.f32 %v24, %v32
  %v39 = vmul.f32 %v25, %v32
  %v40 = vmul.f32 %v26, %v32
  %v41 = vmul.f32 %v27, %v32
  %v42 = vld [vmem:[%s3] sm:$0xff]
  %44 = vset.pattern.permute.xlu0 0
  %45 = vperm.xlu0 %44, %v42
  %v46 = vpop.permute.xlu0 %45
  %v48 = vadd.f32 %v34, %v46
  %v49 = vadd.f32 %v35, %v46
  %v50 = vadd.f32 %v36, %v46
  %v51 = vadd.f32 %v37, %v46
  %v52 = vadd.f32 %v38, %v46
  %v53 = vadd.f32 %v39, %v46
  %v54 = vadd.f32 %v40, %v46
  %v55 = vadd.f32 %v41, %v46
  %v56 = vld [vmem:[%s1] sm:$0xff]
  %v57 = vld [vmem:[%s1 + $0x8] sm:$0xff]
  %v58 = vld [vmem:[%s1 + $0x10] sm:$0xff]
  %v59 = vld [vmem:[%s1 + $0x18] sm:$0xff]
  %v60 = vld [vmem:[%s1 + $0x20] sm:$0xff]
  %v61 = vld [vmem:[%s1 + $0x28] sm:$0xff]
  %v62 = vld [vmem:[%s1 + $0x30] sm:$0xff]
  %v63 = vld [vmem:[%s1 + $0x38] sm:$0xff]
  %v64 = vadd.f32 %v48, %v56
  %v65 = vadd.f32 %v49, %v57
  %v66 = vadd.f32 %v50, %v58
  %v67 = vadd.f32 %v51, %v59
  %v68 = vadd.f32 %v52, %v60
  %v69 = vadd.f32 %v53, %v61
  %v70 = vadd.f32 %v54, %v62
  %v71 = vadd.f32 %v55, %v63
  %vm72 = vcmp.gt.f32.partialorder %v64, 0.0
  %vm73 = vcmp.gt.f32.partialorder %v65, 0.0
  %vm74 = vcmp.gt.f32.partialorder %v66, 0.0
  %vm75 = vcmp.gt.f32.partialorder %v67, 0.0
  %vm76 = vcmp.gt.f32.partialorder %v68, 0.0
  %vm77 = vcmp.gt.f32.partialorder %v69, 0.0
  %vm78 = vcmp.gt.f32.partialorder %v70, 0.0
  %vm79 = vcmp.gt.f32.partialorder %v71, 0.0
  %v80 = vld [vmem:[%s4] sm:$0xff]
  %82 = vset.pattern.permute.xlu0 0
  %83 = vperm.xlu0 %82, %v80
  %v84 = vpop.permute.xlu0 %83
  %v86 = vmul.f32 %v64, %v84
  %v87 = vmul.f32 %v65, %v84
  %v88 = vmul.f32 %v66, %v84
  %v89 = vmul.f32 %v67, %v84
  %v90 = vmul.f32 %v68, %v84
  %v91 = vmul.f32 %v69, %v84
  %v92 = vmul.f32 %v70, %v84
  %v93 = vmul.f32 %v71, %v84
  %v94 = vsel %vm72, %v64, %v86
  %v95 = vsel %vm73, %v65, %v87
  %v96 = vsel %vm74, %v66, %v88
  %v97 = vsel %vm75, %v67, %v89
  %v98 = vsel %vm76, %v68, %v90
  %v99 = vsel %vm77, %v69, %v91
  %v100 = vsel %vm78, %v70, %v92
  %v101 = vsel %vm79, %v71, %v93
  %102 = vst [vmem:[%s5] sm:$0xff] %v94
  %103 = vst [vmem:[%s5 + $0x8] sm:$0xff] %v95
  %104 = vst [vmem:[%s5 + $0x10] sm:$0xff] %v96
  %105 = vst [vmem:[%s5 + $0x18] sm:$0xff] %v97
  %106 = vst [vmem:[%s5 + $0x20] sm:$0xff] %v98
  %107 = vst [vmem:[%s5 + $0x28] sm:$0xff] %v99
  %108 = vst [vmem:[%s5 + $0x30] sm:$0xff] %v100
  %109 = vst [vmem:[%s5 + $0x38] sm:$0xff] %v101
  // Predicated region
  $region22: #{residual_layer_forward.5} parent=0 // pred_check
    _
  $region23: #{residual_layer_forward.5} parent=0 // pred_check_branch
    %111 = sbr.rel (0) target = $region25
  $region24: #{residual_layer_forward.5} parent=0 // pred_region
    _
  $region25: #{residual_layer_forward.5} parent=0 // pred_fallthru
    _
  // Predicated region
  $region26: #{residual_layer_forward.5} parent=0 // pred_check
    _
  $region27: #{residual_layer_forward.5} parent=0 // pred_check_branch
    %113 = sbr.rel (0) target = $region29
  $region28: #{residual_layer_forward.5} parent=0 // pred_region
    _
  $region29: #{residual_layer_forward.5} parent=0 // pred_fallthru
    _

</llo_original>
